<compile_context>
chip_gen: v7x
topology: tpu7x:2x2x1
jax: 0.10.0
libtpu: 0.0.40
codegen_flags: <defaults>
</compile_context>

<pallas_src>
import numpy as np
import jax
import jax.numpy as jnp
from jax.experimental import pallas as pl
from jax.experimental.pallas import tpu as pltpu

H = W = 32                       # module is hard-coded for a 32x32 feature map
HW = H * W
POOL_OUT_SIZES = (1, 2, 4, 8)    # AvgPool2d kernels 32,16,8,4 on a 32x32 map
POOL_SIZES2 = tuple(s * s for s in POOL_OUT_SIZES)                      # (1, 4, 16, 64)
POOL_OFFS = tuple(int(o) for o in np.cumsum((0,) + POOL_SIZES2)[:-1])   # (0, 1, 5, 21)
POOL_TOTAL = sum(POOL_SIZES2)    # 85
P_PAD = 128                      # stacked pool axis padded to one lane tile
NEG = -1e30                      # "-inf" in the bias/mask slab (relu(x + NEG) = 0)


def _pool_matrix(out_size, in_size):
    """(out_size^2, in_size^2) block-average matrix (AvgPool2d, stride = kernel)."""
    k = in_size // out_size
    P = np.zeros((out_size, in_size), np.float32)
    for o in range(out_size):
        P[o, o * k:(o + 1) * k] = 1.0 / k
    return np.kron(P, P)


def _upsample_matrix(out_size, in_size):
    """(out_size^2, in_size^2) bilinear upsample matrix, torch align_corners=False."""
    L = np.zeros((out_size, in_size), np.float32)
    scale = in_size / out_size
    for o in range(out_size):
        src = max((o + 0.5) * scale - 0.5, 0.0)
        i0 = min(int(np.floor(src)), in_size - 1)
        i1 = min(i0 + 1, in_size - 1)
        l1 = src - i0
        L[o, i0] += 1.0 - l1
        L[o, i1] += l1
    return np.kron(L, L)


# --------------------------------------------------------------------------------------
# Kernel
# --------------------------------------------------------------------------------------
def ppm_kernel(x_ref, wox_ref, wbr_ref, mpt_ref, bmask_ref, wbig_ref, mut_ref, bo_ref,
               o_ref):
    # Constant parameter tiles (identical across the grid; loaded once per step and
    # kept out of the per-image loop).
    wox = wox_ref[...]      # (C, C)   bf16 : out-conv weight, raw-x slice of the concat
    wbr = wbr_ref[...]      # (C, C)   bf16 : 4 branch 1x1 convs stacked row-wise (BN folded)
    mpt = mpt_ref[...]      # (HW, P)  bf16 : 4 avg-pool matrices stacked column-wise (exact)
    bmask = bmask_ref[...]  # (C, P)   f32  : folded branch BN bias where valid, -1e30 else
    wbig = wbig_ref[...]    # (C, C)   bf16 : out-conv weights for the 4 upsampled branches
    mut = mut_ref[...]      # (P, HW)  bf16 : 4 bilinear upsample matrices stacked row-wise
    C = wox_ref.shape[0]
    # Hoisted lane-broadcast of the out-conv bias (JAX does not CSE broadcast_in_dim).
    bo_b = jnp.broadcast_to(bo_ref[...], (C, HW))           # (C, HW) f32

    def per_image(b, carry):
        x = x_ref[b]                                                        # (C, HW) bf16
        # torch order: all four avg-pools first, in one dense matmul (K = HW = 1024)
        px = jnp.dot(x, mpt, preferred_element_type=jnp.float32)            # (C, P)
        # ... then the four branch 1x1 convs on the pooled maps (tiny K = C matmul)
        py = jnp.dot(wbr, px.astype(jnp.bfloat16),
                     preferred_element_type=jnp.float32)                    # (C, P)
        # per-branch folded-BN bias + ReLU; the -1e30 slab zeroes every (branch-row,
        # pool-column) combination that belongs to a different branch (and the padding)
        y = jnp.maximum(py + bmask, 0.0)                                     # (C, P)
        # out-conv weights for the branch features, applied before the upsample
        z = jnp.dot(wbig, y.astype(jnp.bfloat16),
                    preferred_element_type=jnp.float32)                      # (C, P)
        # all four bilinear upsamples in one dense matmul (N = HW = 1024)
        up = jnp.dot(z.astype(jnp.bfloat16), mut,
                     preferred_element_type=jnp.float32)                     # (C, HW)
        # out-conv on the raw-x slice of the concat, computed LAST so its (C, HW) f32
        # value is only live across the final add (lower vreg/VMEM pressure)
        accx = jnp.dot(wox, x, preferred_element_type=jnp.float32)           # (C, HW)
        o_ref[b] = jnp.maximum(accx + up + bo_b, 0.0).astype(o_ref.dtype)
        return carry

    # fori_loop (not a static Python unroll) bounds each image's live set to one iteration.
    jax.lax.fori_loop(0, x_ref.shape[0], per_image, 0)


# --------------------------------------------------------------------------------------
# Parameters (random, BN folded) — packed form for the kernel + plain form for reference
# --------------------------------------------------------------------------------------
def init_params(key, in_channels):
    C = in_channels
    Cq = C // 4
    eps = 1e-5
    keys = jax.random.split(key, 25)

    def bn_fold(w, ks, out_c):
        kg, kb, km, kv = ks
        gamma = 1.0 + 0.1 * jax.random.normal(kg, (out_c,), jnp.float32)
        beta = 0.1 * jax.random.normal(kb, (out_c,), jnp.float32)
        mean = 0.1 * jax.random.normal(km, (out_c,), jnp.float32)
        var = jnp.abs(jax.random.normal(kv, (out_c,), jnp.float32)) + 0.5
        scale = gamma / jnp.sqrt(var + eps)
        return w * scale[:, None], beta - mean * scale

    # four branch 1x1 convs (Cq, C) with folded BatchNorm
    w_br, b_br = [], []
    for i in range(4):
        base = 5 * i
        w = 0.1 * jax.random.normal(keys[base], (Cq, C), jnp.float32)
        w_eff, b_eff = bn_fold(w, keys[base + 1:base + 5], Cq)
        w_br.append(w_eff)            # (Cq, C)
        b_br.append(b_eff)            # (Cq,)

    # output 1x1 conv over the 2C-channel concat, with folded BatchNorm
    base = 20
    w_out = 0.1 * jax.random.normal(keys[base], (C, 2 * C), jnp.float32)
    w_out, b_out = bn_fold(w_out, keys[base + 1:base + 5], C)

    mp = [_pool_matrix(s, H) for s in POOL_OUT_SIZES]        # (s^2, HW) each
    mu = [_upsample_matrix(H, s) for s in POOL_OUT_SIZES]    # (HW, s^2) each

    plain = dict(w_br=w_br, b_br=[jnp.asarray(b) for b in b_br],
                 w_out=w_out, b_out=b_out,
                 mp=[jnp.asarray(m) for m in mp], mu=[jnp.asarray(m) for m in mu])

    # ---- packed / fused parameters for the kernel ----
    mpt = np.zeros((HW, P_PAD), np.float32)       # stacked pool (transposed), zero-padded
    mut = np.zeros((P_PAD, HW), np.float32)       # stacked upsample (transposed), zero-padded
    bmask = np.full((C, P_PAD), NEG, np.float32)  # bias where (branch,channel) valid, -inf else
    for i, s2 in enumerate(POOL_SIZES2):
        o = POOL_OFFS[i]
        mpt[:, o:o + s2] = mp[i].T
        mut[o:o + s2, :] = mu[i].T
        bmask[i * Cq:(i + 1) * Cq, o:o + s2] = np.asarray(b_br[i])[:, None]

    packed = dict(
        w_ox=w_out[:, :C].astype(jnp.bfloat16),                             # (C, C)
        w_brcat=jnp.concatenate(w_br, axis=0).astype(jnp.bfloat16),         # (C, C)
        mpt=jnp.asarray(mpt).astype(jnp.bfloat16),    # 1/k^2 entries: bit-exact in bf16
        bmask=jnp.asarray(bmask),                                           # (C, 128) f32
        wbig=w_out[:, C:2 * C].astype(jnp.bfloat16),                        # (C, C)
        mut=jnp.asarray(mut).astype(jnp.bfloat16),    # bilinear weights, ~2^-9 rounding
        bo=b_out[:, None],                                                  # (C, 1) f32
    )
    return packed, plain


# --------------------------------------------------------------------------------------
# Wrapper
# --------------------------------------------------------------------------------------
def _vmem_capacity_bytes():
    try:
        return int(pltpu.get_tpu_info().vmem_capacity_bytes)
    except Exception:
        return 64 << 20          # conservative fallback: v7x per-TC VMEM


def _pick_block_n(N, C, out_bytes, block_n=None):
    """Images per grid step: amortize the ~0.35us/step overhead while (a) keeping the
    double-buffered x/out blocks well inside VMEM and (b) preferring an even number of
    grid steps so v7x's two TensorCores stay balanced."""
    if block_n is not None:
        nb = max(1, min(int(block_n), N))
        while N % nb:
            nb -= 1
        return nb
    cap = _vmem_capacity_bytes()
    budget = max(8 << 20, (cap - (16 << 20)) // 2)        # share for the streamed x/out blocks
    per_img = 2 * C * HW * (2 + out_bytes)                # double-buffered bf16 x + out block
    nb_cap = int(max(1, min(8, budget // max(per_img, 1))))
    divs = [d for d in range(1, N + 1) if N % d == 0 and d <= nb_cap] or [1]
    even = [d for d in divs if (N // d) % 2 == 0]         # even #steps -> balanced megacore
    multi = [d for d in divs if N // d >= 2]
    pool = even or multi or divs
    return max(pool)


def _vmem_limit_bytes(nb, C, out_bytes):
    x_block = nb * C * HW * 2                              # bf16 input block
    o_block = nb * C * HW * out_bytes                      # output block
    consts = 2 * HW * P_PAD * 2 + C * P_PAD * 4 + 3 * C * C * 2 + 4 * C   # bf16 mats + f32 mask/bias
    scratch = 4 * C * HW * 4 + 4 * C * P_PAD * 4           # in-kernel f32 temporaries (rough)
    need = 2 * (x_block + o_block + consts) + scratch + (4 << 20)
    cap = _vmem_capacity_bytes()
    # Never request the full physical VMEM (leave >=12 MiB for compiler-internal scratch;
    # matters most on v7x's 64 MiB per TC).
    return int(max(16 << 20, min(max(need, 24 << 20), cap - (12 << 20))))


def pyramid_pooling(x_nchw, packed, *, block_n=None, out_dtype=jnp.float32):
    N, C, Hh, Ww = x_nchw.shape
    assert (Hh, Ww) == (H, W), "module is defined for a 32x32 feature map"
    assert C % 4 == 0, "in_channels must be divisible by 4"

    # NCHW-native layout: (N, C, HW).  Pure reshape — no transpose on either side.
    x_flat = x_nchw.reshape(N, C, HW).astype(jnp.bfloat16)

    out_bytes = jnp.dtype(out_dtype).itemsize
    nb = _pick_block_n(N, C, out_bytes, block_n)
    grid = (N // nb,)
    # NOTE: the 7 constant params keep default buffering; after the bf16 cast they total
    # ~0.5-1.5 MiB so single-buffering them (pl.Buffered(1)) is a minor further saving.
    const = lambda a: pl.BlockSpec(a.shape, lambda n: (0,) * a.ndim)

    out_flat = pl.pallas_call(
        ppm_kernel,
        out_shape=jax.ShapeDtypeStruct((N, C, HW), out_dtype),
        grid=grid,
        in_specs=[
            pl.BlockSpec((nb, C, HW), lambda n: (n, 0, 0)),   # x block: nb images / step
            const(packed["w_ox"]),
            const(packed["w_brcat"]),
            const(packed["mpt"]),
            const(packed["bmask"]),
            const(packed["wbig"]),
            const(packed["mut"]),
            const(packed["bo"]),
        ],
        out_specs=pl.BlockSpec((nb, C, HW), lambda n: (n, 0, 0)),   # lane-dense (last dim 1024)
        compiler_params=pltpu.CompilerParams(
            dimension_semantics=("parallel",),
            vmem_limit_bytes=_vmem_limit_bytes(nb, C, out_bytes),
        ),
    )(x_flat, packed["w_ox"], packed["w_brcat"], packed["mpt"], packed["bmask"],
      packed["wbig"], packed["mut"], packed["bo"])

    return out_flat.reshape(N, C, H, W)


# --------------------------------------------------------------------------------------
# References
# --------------------------------------------------------------------------------------
def reference_stacked(x_nchw, packed):
    """Pure-jnp reference with the SAME fusion/stacking and dtypes as the kernel."""
    N, C = x_nchw.shape[:2]
    X = x_nchw.reshape(N, C, HW).astype(jnp.bfloat16)
    px = jnp.einsum("ncs,sp->ncp", X, packed["mpt"], preferred_element_type=jnp.float32)
    py = jnp.einsum("oc,ncp->nop", packed["w_brcat"], px.astype(jnp.bfloat16),
                    preferred_element_type=jnp.float32)
    y = jnp.maximum(py + packed["bmask"][None], 0.0)
    z = jnp.einsum("oc,ncp->nop", packed["wbig"], y.astype(jnp.bfloat16),
                   preferred_element_type=jnp.float32)
    up = jnp.einsum("nop,ps->nos", z.astype(jnp.bfloat16), packed["mut"],
                    preferred_element_type=jnp.float32)
    accx = jnp.einsum("oc,ncs->nos", packed["w_ox"], X, preferred_element_type=jnp.float32)
    out = jnp.maximum(accx + up + packed["bo"][None], 0.0)
    return out.reshape(N, C, H, W)


def reference_naive(x_nchw, plain):
    """Unfused float32 reference that follows the torch module op-by-op (BN folded):
    pool -> 1x1 conv -> ReLU -> bilinear upsample, concat, out 1x1 conv -> ReLU."""
    N, C = x_nchw.shape[:2]
    Cq = C // 4
    X = x_nchw.reshape(N, C, HW).astype(jnp.float32)
    w_out, b_out = plain["w_out"], plain["b_out"]
    acc = jnp.einsum("oc,ncs->nos", w_out[:, :C], X)
    for i in range(4):
        pooled = jnp.einsum("ncs,ps->ncp", X, plain["mp"][i])                      # (N,C,s^2)
        y = jnp.maximum(jnp.einsum("dc,ncp->ndp", plain["w_br"][i], pooled)
                        + plain["b_br"][i][None, :, None], 0.0)                    # (N,Cq,s^2)
        feat = jnp.einsum("ndp,sp->nds", y, plain["mu"][i])                        # (N,Cq,HW)
        acc = acc + jnp.einsum("od,nds->nos", w_out[:, C + i * Cq:C + (i + 1) * Cq], feat)
    out = jnp.maximum(acc + b_out[None, :, None], 0.0)
    return out.reshape(N, C, H, W)


# --------------------------------------------------------------------------------------
if __name__ == "__main__":
    key = jax.random.PRNGKey(0)
    k_x, k_p = jax.random.split(key)
    N, C = 2, 16                      # in_channels must be divisible by 4; spatial fixed 32x32
    x = jax.random.normal(k_x, (N, C, H, W), jnp.float32)
    packed, plain = init_params(k_p, C)

    out = pyramid_pooling(x, packed)
    jax.block_until_ready(out)
    assert out.shape == (N, C, H, W)

    # 1) tight check vs a jnp reference using identical stacking/casts (implementation check)
    ref_s = reference_stacked(x, packed)
    np.testing.assert_allclose(np.asarray(out), np.asarray(ref_s), rtol=2e-3, atol=2e-3)

    # 2) looser check vs the unfused float32 torch-style math (algebra check; tolerance
    #    covers the bf16 casts of x, the conv weights and the pyramid matrices)
    ref_n = reference_naive(x, plain)
    np.testing.assert_allclose(np.asarray(out), np.asarray(ref_n), rtol=5e-2, atol=5e-2)

    print("KERNEL_OK")
</pallas_src>

<mosaic_0001>
module attributes {stable_mosaic.version = 11 : i64} {
  func.func @ppm_kernel(%arg0: i32, %arg1: memref<1x16x1024xbf16, #tpu.memory_space<vmem>>, %arg2: memref<16x16xbf16, #tpu.memory_space<vmem>>, %arg3: memref<16x16xbf16, #tpu.memory_space<vmem>>, %arg4: memref<1024x128xbf16, #tpu.memory_space<vmem>>, %arg5: memref<16x128xf32, #tpu.memory_space<vmem>>, %arg6: memref<16x16xbf16, #tpu.memory_space<vmem>>, %arg7: memref<128x1024xbf16, #tpu.memory_space<vmem>>, %arg8: memref<16x1xf32, #tpu.memory_space<vmem>>, %arg9: memref<1x16x1024xf32, #tpu.memory_space<vmem>>) attributes {dimension_semantics = [#tpu.dimension_semantics<parallel>], iteration_bounds = array<i64: 2>, scalar_prefetch = 0 : i64, scratch_operands = 0 : i64, tpu.core_type = #tpu.core_type<tc>, window_params = [{transform_indices = @transform_0, window_bounds = array<i64: 1, 16, 1024>}, {pipeline_mode = #tpu.pipeline_mode<synchronous>, transform_indices = @transform_1, window_bounds = array<i64: 16, 16>}, {pipeline_mode = #tpu.pipeline_mode<synchronous>, transform_indices = @transform_2, window_bounds = array<i64: 16, 16>}, {pipeline_mode = #tpu.pipeline_mode<synchronous>, transform_indices = @transform_3, window_bounds = array<i64: 1024, 128>}, {pipeline_mode = #tpu.pipeline_mode<synchronous>, transform_indices = @transform_4, window_bounds = array<i64: 16, 128>}, {pipeline_mode = #tpu.pipeline_mode<synchronous>, transform_indices = @transform_5, window_bounds = array<i64: 16, 16>}, {pipeline_mode = #tpu.pipeline_mode<synchronous>, transform_indices = @transform_6, window_bounds = array<i64: 128, 1024>}, {pipeline_mode = #tpu.pipeline_mode<synchronous>, transform_indices = @transform_7, window_bounds = array<i64: 16, 1>}, {transform_indices = @transform_8, window_bounds = array<i64: 1, 16, 1024>}]} {
    %c0 = arith.constant 0 : index
    %c0_0 = arith.constant 0 : index
    %0 = vector.load %arg2[%c0, %c0_0] : memref<16x16xbf16, #tpu.memory_space<vmem>>, vector<16x16xbf16>
    %c0_1 = arith.constant 0 : index
    %c0_2 = arith.constant 0 : index
    %1 = vector.load %arg3[%c0_1, %c0_2] : memref<16x16xbf16, #tpu.memory_space<vmem>>, vector<16x16xbf16>
    %c0_3 = arith.constant 0 : index
    %c0_4 = arith.constant 0 : index
    %2 = vector.load %arg4[%c0_3, %c0_4] : memref<1024x128xbf16, #tpu.memory_space<vmem>>, vector<1024x128xbf16>
    %c0_5 = arith.constant 0 : index
    %c0_6 = arith.constant 0 : index
    %3 = vector.load %arg5[%c0_5, %c0_6] : memref<16x128xf32, #tpu.memory_space<vmem>>, vector<16x128xf32>
    %c0_7 = arith.constant 0 : index
    %c0_8 = arith.constant 0 : index
    %4 = vector.load %arg6[%c0_7, %c0_8] : memref<16x16xbf16, #tpu.memory_space<vmem>>, vector<16x16xbf16>
    %c0_9 = arith.constant 0 : index
    %c0_10 = arith.constant 0 : index
    %5 = vector.load %arg7[%c0_9, %c0_10] : memref<128x1024xbf16, #tpu.memory_space<vmem>>, vector<128x1024xbf16>
    %c0_11 = arith.constant 0 : index
    %c0_12 = arith.constant 0 : index
    %6 = vector.load %arg8[%c0_11, %c0_12] : memref<16x1xf32, #tpu.memory_space<vmem>>, vector<16x1xf32>
    %7 = vector.shape_cast %6 : vector<16x1xf32> to vector<16x1xf32>
    %8 = vector.broadcast %7 : vector<16x1xf32> to vector<16x1024xf32>
    %c0_i32 = arith.constant 0 : i32
    %9 = arith.index_cast %c0_i32 : i32 to index
    %c0_13 = arith.constant 0 : index
    %c0_14 = arith.constant 0 : index
    %10 = vector.load %arg1[%9, %c0_13, %c0_14] : memref<1x16x1024xbf16, #tpu.memory_space<vmem>>, vector<1x16x1024xbf16>
    %11 = vector.shape_cast %10 : vector<1x16x1024xbf16> to vector<16x1024xbf16>
    %cst = arith.constant dense<0.000000e+00> : vector<16x128xf32>
    %12 = tpu.matmul %11, %2, %cst {dimension_numbers = #tpu.dot_dimension_numbers<[1], [0], [0], [1], [0, 0, 1, 1], [], []>} : vector<16x1024xbf16>, vector<1024x128xbf16>, vector<16x128xf32> -> vector<16x128xf32>
    %13 = arith.truncf %12 : vector<16x128xf32> to vector<16x128xbf16>
    %cst_15 = arith.constant dense<0.000000e+00> : vector<16x128xf32>
    %14 = tpu.matmul %1, %13, %cst_15 {dimension_numbers = #tpu.dot_dimension_numbers<[1], [0], [0], [1], [0, 0, 1, 1], [], []>} : vector<16x16xbf16>, vector<16x128xbf16>, vector<16x128xf32> -> vector<16x128xf32>
    %15 = arith.addf %14, %3 : vector<16x128xf32>
    %cst_16 = arith.constant 0.000000e+00 : f32
    %16 = vector.broadcast %cst_16 : f32 to vector<16x128xf32>
    %17 = arith.maximumf %15, %16 : vector<16x128xf32>
    %18 = arith.truncf %17 : vector<16x128xf32> to vector<16x128xbf16>
    %cst_17 = arith.constant dense<0.000000e+00> : vector<16x128xf32>
    %19 = tpu.matmul %4, %18, %cst_17 {dimension_numbers = #tpu.dot_dimension_numbers<[1], [0], [0], [1], [0, 0, 1, 1], [], []>} : vector<16x16xbf16>, vector<16x128xbf16>, vector<16x128xf32> -> vector<16x128xf32>
    %20 = arith.truncf %19 : vector<16x128xf32> to vector<16x128xbf16>
    %cst_18 = arith.constant dense<0.000000e+00> : vector<16x1024xf32>
    %21 = tpu.matmul %20, %5, %cst_18 {dimension_numbers = #tpu.dot_dimension_numbers<[1], [0], [0], [1], [0, 0, 1, 1], [], []>} : vector<16x128xbf16>, vector<128x1024xbf16>, vector<16x1024xf32> -> vector<16x1024xf32>
    %cst_19 = arith.constant dense<0.000000e+00> : vector<16x1024xf32>
    %22 = tpu.matmul %0, %11, %cst_19 {dimension_numbers = #tpu.dot_dimension_numbers<[1], [0], [0], [1], [0, 0, 1, 1], [], []>} : vector<16x16xbf16>, vector<16x1024xbf16>, vector<16x1024xf32> -> vector<16x1024xf32>
    %23 = arith.addf %22, %21 : vector<16x1024xf32>
    %24 = arith.addf %23, %8 : vector<16x1024xf32>
    %cst_20 = arith.constant 0.000000e+00 : f32
    %25 = vector.broadcast %cst_20 : f32 to vector<16x1024xf32>
    %26 = arith.maximumf %24, %25 : vector<16x1024xf32>
    %27 = arith.index_cast %c0_i32 : i32 to index
    %c0_21 = arith.constant 0 : index
    %c0_22 = arith.constant 0 : index
    %28 = vector.load %arg9[%27, %c0_21, %c0_22] : memref<1x16x1024xf32, #tpu.memory_space<vmem>>, vector<1x16x1024xf32>
    %29 = vector.shape_cast %28 : vector<1x16x1024xf32> to vector<16x1024xf32>
    %30 = vector.shape_cast %26 : vector<16x1024xf32> to vector<1x16x1024xf32>
    tpu.vector_store %arg9[%27, %c0_21, %c0_22], %30 {strides = array<i32>} : memref<1x16x1024xf32, #tpu.memory_space<vmem>>, vector<1x16x1024xf32>,
    %c1_i32 = arith.constant 1 : i32
    return
  }
  func.func @transform_0(%arg0: i32) -> (i32, i32, i32) {
    %c0_i32 = arith.constant 0 : i32
    %c0_i32_0 = arith.constant 0 : i32
    %c0_i32_1 = arith.constant 0 : i32
    return %arg0, %c0_i32, %c0_i32_0 : i32, i32, i32
  }
  func.func @transform_1(%arg0: i32) -> (i32, i32) {
    %c0_i32 = arith.constant 0 : i32
    %c0_i32_0 = arith.constant 0 : i32
    %c0_i32_1 = arith.constant 0 : i32
    return %c0_i32, %c0_i32_0 : i32, i32
  }
  func.func @transform_2(%arg0: i32) -> (i32, i32) {
    %c0_i32 = arith.constant 0 : i32
    %c0_i32_0 = arith.constant 0 : i32
    %c0_i32_1 = arith.constant 0 : i32
    return %c0_i32, %c0_i32_0 : i32, i32
  }
  func.func @transform_3(%arg0: i32) -> (i32, i32) {
    %c0_i32 = arith.constant 0 : i32
    %c0_i32_0 = arith.constant 0 : i32
    %c0_i32_1 = arith.constant 0 : i32
    return %c0_i32, %c0_i32_0 : i32, i32
  }
  func.func @transform_4(%arg0: i32) -> (i32, i32) {
    %c0_i32 = arith.constant 0 : i32
    %c0_i32_0 = arith.constant 0 : i32
    %c0_i32_1 = arith.constant 0 : i32
    return %c0_i32, %c0_i32_0 : i32, i32
  }
  func.func @transform_5(%arg0: i32) -> (i32, i32) {
    %c0_i32 = arith.constant 0 : i32
    %c0_i32_0 = arith.constant 0 : i32
    %c0_i32_1 = arith.constant 0 : i32
    return %c0_i32, %c0_i32_0 : i32, i32
  }
  func.func @transform_6(%arg0: i32) -> (i32, i32) {
    %c0_i32 = arith.constant 0 : i32
    %c0_i32_0 = arith.constant 0 : i32
    %c0_i32_1 = arith.constant 0 : i32
    return %c0_i32, %c0_i32_0 : i32, i32
  }
  func.func @transform_7(%arg0: i32) -> (i32, i32) {
    %c0_i32 = arith.constant 0 : i32
    %c0_i32_0 = arith.constant 0 : i32
    %c0_i32_1 = arith.constant 0 : i32
    return %c0_i32, %c0_i32_0 : i32, i32
  }
  func.func @transform_8(%arg0: i32) -> (i32, i32, i32) {
    %c0_i32 = arith.constant 0 : i32
    %c0_i32_0 = arith.constant 0 : i32
    %c0_i32_1 = arith.constant 0 : i32
    return %arg0, %c0_i32, %c0_i32_0 : i32, i32, i32
  }
}

</mosaic_0001>

<llo_original>
// kernel: tpu_custom_call.1
$region0: #{tpu_custom_call.1}
  #allocation0 [shape = 'u32[]', space=smem, size = 0x4, offset = 0x4, fixed_abs, tag = 'smem constant byte address 0x4 - core index']
  #allocation1 [shape = 'u32[144,128]{1,0:T(1,128)}', space=vmem, size = 0x12000, scoped, tag = 'internal scratch']
  %s0 = inlined_call_operand.hbm [shape: bf16[2,16,1024], index: 0, kind: input, shape index: {}]
  %s1 = inlined_call_operand.vmem [shape: bf16[16,16], index: 1, kind: input, shape index: {}]
  %s2 = inlined_call_operand.vmem [shape: bf16[16,16], index: 2, kind: input, shape index: {}]
  %s3 = inlined_call_operand.hbm [shape: bf16[1024,128], index: 3, kind: input, shape index: {}]
  %s4 = inlined_call_operand.vmem [shape: f32[16,128], index: 4, kind: input, shape index: {}]
  %s5 = inlined_call_operand.hbm [shape: bf16[16,16], index: 5, kind: input, shape index: {}]
  %s6 = inlined_call_operand.hbm [shape: bf16[128,1024], index: 6, kind: input, shape index: {}]
  %s7 = inlined_call_operand.vmem [shape: f32[16,1], index: 7, kind: input, shape index: {}]
  %s8 = inlined_call_operand.hbm [shape: f32[2,16,1024], index: 8, kind: output, shape index: {}]
  %s9 = sld [smem:[#allocation0]]
  $region81: #{tpu_custom_call.1} parent=0
    _
  %s11 = ssub.s32 1, %s9
  %s12 = scalar_select 0, %s11, %s9
  $region1: #{tpu_custom_call.1} parent=0
    #allocation2 [shape = 'u8[65536]{0}', space=vmem, size = 0x10000, scoped, tag = 'input window, operand 0']
    #allocation3 [shape = 's32[2]{0}', space=sflag, size = 0x8, scoped, tag = 'scoped memory for tpu_custom_call.1']
    #allocation4 [shape = 's32[2]{0}', space=sflag, size = 0x8, scoped, tag = 'scoped memory for tpu_custom_call.1']
    #allocation5 [shape = 'u8[262144]{0}', space=vmem, size = 0x40000, scoped, tag = 'input window, operand 3, single buffered']
    #allocation6 [shape = 's32[1]{0}', space=sflag, size = 0x4, scoped, tag = 'scoped memory for tpu_custom_call.1']
    #allocation7 [shape = 'u8[4096]{0}', space=vmem, size = 0x1000, scoped, tag = 'input window, operand 5, single buffered']
    #allocation8 [shape = 'u8[262144]{0}', space=vmem, size = 0x40000, scoped, tag = 'input window, operand 6, single buffered']
    #allocation9 [shape = 's32[1]{0}', space=sflag, size = 0x4, scoped, tag = 'scoped memory for tpu_custom_call.1']
    #allocation10 [shape = 'u8[131072]{0}', space=vmem, size = 0x20000, scoped, tag = 'output window, operand 0']
    %13 = vsyncpa [#allocation3], 0
    %s14 = scalar_lea.sflag [#allocation3], 1
    %15 = vsyncpa %s14, 0
    %16 = vsyncpa [#allocation6], 0
    %17 = vsyncpa [#allocation9], 0
    %18 = vsyncpa [#allocation4], 0
    %s19 = scalar_lea.sflag [#allocation4], 1
    %20 = vsyncpa %s19, 0
    loop: start=0, step=1, limit=4
    $region2: #{tpu_custom_call.1} parent=1 // loop_pre_header
      _
    $region3: #{tpu_custom_call.1} parent=1 // loop_header
      %s22 = sphi 0, %s26
      %p23 = scmp.ge.s32.totalorder %s22, 4
      %s32 = sphi 0, %s34
      %s35 = sphi 0, %s32
      %s36 = sphi 0, %s35
      %s52 = sphi 0, %s36
      %s56 = sphi 0, %s56
      %s58 = sphi 0, %s56
      %s59 = sphi 0, %s58
      %s73 = sphi 0, %s59
      %s77 = sphi 0, %s77
      %s79 = sphi 0, %s77
      %s80 = sphi 0, %s79
      %s94 = sphi 0, %s80
      %s98 = sphi 0, %s98
      %s100 = sphi 0, %s98
      %s101 = sphi 0, %s100
      %s115 = sphi 0, %s101
      %s119 = sphi 0, %s119
      %s121 = sphi 0, %s119
      %s122 = sphi 0, %s121
      %s136 = sphi 0, %s122
      %s140 = sphi 0, %s140
      %s142 = sphi 0, %s140
      %s143 = sphi 0, %s142
      %s157 = sphi 0, %s143
      %s161 = sphi 0, %s161
      %s163 = sphi 0, %s161
      %s164 = sphi 0, %s163
      %s178 = sphi 0, %s164
      %s182 = sphi 0, %s182
      %s184 = sphi 0, %s182
      %s185 = sphi 0, %s184
      %s199 = sphi 0, %s185
      %s205 = sphi 0, %s207
      %s208 = sphi 0, %s205
      %s209 = sphi 0, %s208
      %s225 = sphi 0, %s209
    $region4: #{tpu_custom_call.1} parent=1 // loop_header_branch
      %25 = sbr.rel (%p23) target = $region8
    $region5: #{tpu_custom_call.1} parent=1 // loop_body
      %s27 = ssub.s32 %s22, 1
      %s28 = ssub.s32 %s22, 2
      %s29 = sadd.s32 %s22, 1
      %s30 = ssub.s32 %s22, %s29
      %p31 = scmp.eq.s32.totalorder %s30, 0
      %s33 = sadd.s32 %s32, 1
      %s34 = scalar_select %p31, %s32, %s33
      %p37 = pneg %p31
      %p38 = scmp.eq.s32.totalorder %s22, 1
      %p39 = por %p37, %p38
      %p40 = scmp.ne.s32.totalorder %s32, %s35
      %p41 = scmp.eq.s32.totalorder %s22, 0
      %p42 = por %p40, %p41
      %p43 = scmp.ne.s32.totalorder %s32, %s35
      %p44 = scmp.eq.s32.totalorder %s27, 1
      %p45 = por %p43, %p44
      %p46 = scmp.ne.s32.totalorder %s35, %s36
      %p47 = scmp.eq.s32.totalorder %s27, 0
      %p48 = por %p46, %p47
      %p49 = scmp.ne.s32.totalorder %s35, %s36
      %p50 = scmp.eq.s32.totalorder %s28, 1
      %p51 = por %p49, %p50
      %p53 = scmp.ne.s32.totalorder %s36, %s52
      %p54 = scmp.eq.s32.totalorder %s28, 0
      %p55 = por %p53, %p54
      %s57 = sadd.s32 %s56, 1
      %p60 = scmp.eq.s32.totalorder %s22, 1
      %p61 = scmp.ne.s32.totalorder %s56, %s58
      %p62 = scmp.eq.s32.totalorder %s22, 0
      %p63 = por %p61, %p62
      %p64 = scmp.ne.s32.totalorder %s56, %s58
      %p65 = scmp.eq.s32.totalorder %s27, 1
      %p66 = por %p64, %p65
      %p67 = scmp.ne.s32.totalorder %s58, %s59
      %p68 = scmp.eq.s32.totalorder %s27, 0
      %p69 = por %p67, %p68
      %p70 = scmp.ne.s32.totalorder %s58, %s59
      %p71 = scmp.eq.s32.totalorder %s28, 1
      %p72 = por %p70, %p71
      %p74 = scmp.ne.s32.totalorder %s59, %s73
      %p75 = scmp.eq.s32.totalorder %s28, 0
      %p76 = por %p74, %p75
      %s78 = sadd.s32 %s77, 1
      %p81 = scmp.eq.s32.totalorder %s22, 1
      %p82 = scmp.ne.s32.totalorder %s77, %s79
      %p83 = scmp.eq.s32.totalorder %s22, 0
      %p84 = por %p82, %p83
      %p85 = scmp.ne.s32.totalorder %s77, %s79
      %p86 = scmp.eq.s32.totalorder %s27, 1
      %p87 = por %p85, %p86
      %p88 = scmp.ne.s32.totalorder %s79, %s80
      %p89 = scmp.eq.s32.totalorder %s27, 0
      %p90 = por %p88, %p89
      %p91 = scmp.ne.s32.totalorder %s79, %s80
      %p92 = scmp.eq.s32.totalorder %s28, 1
      %p93 = por %p91, %p92
      %p95 = scmp.ne.s32.totalorder %s80, %s94
      %p96 = scmp.eq.s32.totalorder %s28, 0
      %p97 = por %p95, %p96
      %s99 = sadd.s32 %s98, 1
      %p102 = scmp.eq.s32.totalorder %s22, 1
      %p103 = scmp.ne.s32.totalorder %s98, %s100
      %p104 = scmp.eq.s32.totalorder %s22, 0
      %p105 = por %p103, %p104
      %p106 = scmp.ne.s32.totalorder %s98, %s100
      %p107 = scmp.eq.s32.totalorder %s27, 1
      %p108 = por %p106, %p107
      %p109 = scmp.ne.s32.totalorder %s100, %s101
      %p110 = scmp.eq.s32.totalorder %s27, 0
      %p111 = por %p109, %p110
      %p112 = scmp.ne.s32.totalorder %s100, %s101
      %p113 = scmp.eq.s32.totalorder %s28, 1
      %p114 = por %p112, %p113
      %p116 = scmp.ne.s32.totalorder %s101, %s115
      %p117 = scmp.eq.s32.totalorder %s28, 0
      %p118 = por %p116, %p117
      %s120 = sadd.s32 %s119, 1
      %p123 = scmp.eq.s32.totalorder %s22, 1
      %p124 = scmp.ne.s32.totalorder %s119, %s121
      %p125 = scmp.eq.s32.totalorder %s22, 0
      %p126 = por %p124, %p125
      %p127 = scmp.ne.s32.totalorder %s119, %s121
      %p128 = scmp.eq.s32.totalorder %s27, 1
      %p129 = por %p127, %p128
      %p130 = scmp.ne.s32.totalorder %s121, %s122
      %p131 = scmp.eq.s32.totalorder %s27, 0
      %p132 = por %p130, %p131
      %p133 = scmp.ne.s32.totalorder %s121, %s122
      %p134 = scmp.eq.s32.totalorder %s28, 1
      %p135 = por %p133, %p134
      %p137 = scmp.ne.s32.totalorder %s122, %s136
      %p138 = scmp.eq.s32.totalorder %s28, 0
      %p139 = por %p137, %p138
      %s141 = sadd.s32 %s140, 1
      %p144 = scmp.eq.s32.totalorder %s22, 1
      %p145 = scmp.ne.s32.totalorder %s140, %s142
      %p146 = scmp.eq.s32.totalorder %s22, 0
      %p147 = por %p145, %p146
      %p148 = scmp.ne.s32.totalorder %s140, %s142
      %p149 = scmp.eq.s32.totalorder %s27, 1
      %p150 = por %p148, %p149
      %p151 = scmp.ne.s32.totalorder %s142, %s143
      %p152 = scmp.eq.s32.totalorder %s27, 0
      %p153 = por %p151, %p152
      %p154 = scmp.ne.s32.totalorder %s142, %s143
      %p155 = scmp.eq.s32.totalorder %s28, 1
      %p156 = por %p154, %p155
      %p158 = scmp.ne.s32.totalorder %s143, %s157
      %p159 = scmp.eq.s32.totalorder %s28, 0
      %p160 = por %p158, %p159
      %s162 = sadd.s32 %s161, 1
      %p165 = scmp.eq.s32.totalorder %s22, 1
      %p166 = scmp.ne.s32.totalorder %s161, %s163
      %p167 = scmp.eq.s32.totalorder %s22, 0
      %p168 = por %p166, %p167
      %p169 = scmp.ne.s32.totalorder %s161, %s163
      %p170 = scmp.eq.s32.totalorder %s27, 1
      %p171 = por %p169, %p170
      %p172 = scmp.ne.s32.totalorder %s163, %s164
      %p173 = scmp.eq.s32.totalorder %s27, 0
      %p174 = por %p172, %p173
      %p175 = scmp.ne.s32.totalorder %s163, %s164
      %p176 = scmp.eq.s32.totalorder %s28, 1
      %p177 = por %p175, %p176
      %p179 = scmp.ne.s32.totalorder %s164, %s178
      %p180 = scmp.eq.s32.totalorder %s28, 0
      %p181 = por %p179, %p180
      %s183 = sadd.s32 %s182, 1
      %p186 = scmp.eq.s32.totalorder %s22, 1
      %p187 = scmp.ne.s32.totalorder %s182, %s184
      %p188 = scmp.eq.s32.totalorder %s22, 0
      %p189 = por %p187, %p188
      %p190 = scmp.ne.s32.totalorder %s182, %s184
      %p191 = scmp.eq.s32.totalorder %s27, 1
      %p192 = por %p190, %p191
      %p193 = scmp.ne.s32.totalorder %s184, %s185
      %p194 = scmp.eq.s32.totalorder %s27, 0
      %p195 = por %p193, %p194
      %p196 = scmp.ne.s32.totalorder %s184, %s185
      %p197 = scmp.eq.s32.totalorder %s28, 1
      %p198 = por %p196, %p197
      %p200 = scmp.ne.s32.totalorder %s185, %s199
      %p201 = scmp.eq.s32.totalorder %s28, 0
      %p202 = por %p200, %p201
      %s203 = ssub.s32 %s22, %s29
      %p204 = scmp.eq.s32.totalorder %s203, 0
      %s206 = sadd.s32 %s205, 1
      %s207 = scalar_select %p204, %s205, %s206
      %p210 = pneg %p204
      %p211 = scmp.eq.s32.totalorder %s22, 1
      %p212 = por %p210, %p211
      %p213 = scmp.ne.s32.totalorder %s205, %s208
      %p214 = scmp.eq.s32.totalorder %s22, 0
      %p215 = por %p213, %p214
      %p216 = scmp.ne.s32.totalorder %s205, %s208
      %p217 = scmp.eq.s32.totalorder %s27, 1
      %p218 = por %p216, %p217
      %p219 = scmp.ne.s32.totalorder %s208, %s209
      %p220 = scmp.eq.s32.totalorder %s27, 0
      %p221 = por %p219, %p220
      %p222 = scmp.ne.s32.totalorder %s208, %s209
      %p223 = scmp.eq.s32.totalorder %s28, 1
      %p224 = por %p222, %p223
      %p226 = scmp.ne.s32.totalorder %s209, %s225
      %p227 = scmp.eq.s32.totalorder %s28, 0
      %p228 = por %p226, %p227
      %p229 = scmp.le.s32.totalorder 1, %s22
      %p230 = scmp.lt.s32.totalorder %s22, 3
      %p231 = pnand %p229, %p230
      %p232 = pneg %p231
      // Predicated region
      $region9: #{tpu_custom_call.1} parent=5 // pred_check
        _
      $region10: #{tpu_custom_call.1} parent=5 // pred_check_branch
        %234 = sbr.rel (%p231) target = $region12
      $region11: #{tpu_custom_call.1} parent=5 // pred_region
        %s235 = ssub.s32 %s22, 1
        // Predicated region
        $region13: #{tpu_custom_call.1} parent=11 // pred_check
          %p236 = pneg %p69
        $region14: #{tpu_custom_call.1} parent=11 // pred_check_branch
          %238 = sbr.rel (%p236) target = $region16
        $region15: #{tpu_custom_call.1} parent=11 // pred_region
          _
        $region16: #{tpu_custom_call.1} parent=11 // pred_fallthru
          _
        // Predicated region
        $region17: #{tpu_custom_call.1} parent=11 // pred_check
          %p239 = pneg %p90
        $region18: #{tpu_custom_call.1} parent=11 // pred_check_branch
          %241 = sbr.rel (%p239) target = $region20
        $region19: #{tpu_custom_call.1} parent=11 // pred_region
          _
        $region20: #{tpu_custom_call.1} parent=11 // pred_fallthru
          _
        // Predicated region
        $region21: #{tpu_custom_call.1} parent=11 // pred_check
          %p242 = pneg %p111
        $region22: #{tpu_custom_call.1} parent=11 // pred_check_branch
          %244 = sbr.rel (%p242) target = $region24
        $region23: #{tpu_custom_call.1} parent=11 // pred_region
          %s246 = ssub.s32 8192, 8192
          %247 = vsyncadd [#allocation6], %s246
          %s248 = sshll.u32 [#allocation5], 4
          %s249 = int_to_ptr.vmem [resolvable:$true] %s248
          %254 = dma.hbm_to_vmem [thread:$0]  %s3, 8192, %s249, [#allocation6], 64, 64, 4
        $region24: #{tpu_custom_call.1} parent=11 // pred_fallthru
          _
        // Predicated region
        $region25: #{tpu_custom_call.1} parent=11 // pred_check
          %p255 = pneg %p132
        $region26: #{tpu_custom_call.1} parent=11 // pred_check_branch
          %257 = sbr.rel (%p255) target = $region28
        $region27: #{tpu_custom_call.1} parent=11 // pred_region
          _
        $region28: #{tpu_custom_call.1} parent=11 // pred_fallthru
          _
        // Predicated region
        $region29: #{tpu_custom_call.1} parent=11 // pred_check
          %p258 = pneg %p153
        $region30: #{tpu_custom_call.1} parent=11 // pred_check_branch
          %260 = sbr.rel (%p258) target = $region32
        $region31: #{tpu_custom_call.1} parent=11 // pred_region
          %s262 = ssub.s32 128, 128
          %263 = vsyncadd [#allocation6], %s262
          %s264 = sshll.u32 [#allocation7], 4
          %s265 = int_to_ptr.vmem [resolvable:$true] %s264
          %270 = dma.hbm_to_vmem [thread:$0]  %s5, 128, %s265, [#allocation6], 64, 64, 4
        $region32: #{tpu_custom_call.1} parent=11 // pred_fallthru
          _
        // Predicated region
        $region33: #{tpu_custom_call.1} parent=11 // pred_check
          %p271 = pneg %p174
        $region34: #{tpu_custom_call.1} parent=11 // pred_check_branch
          %273 = sbr.rel (%p271) target = $region36
        $region35: #{tpu_custom_call.1} parent=11 // pred_region
          %s275 = ssub.s32 8192, 8192
          %276 = vsyncadd [#allocation9], %s275
          %s277 = sshll.u32 [#allocation8], 4
          %s278 = int_to_ptr.vmem [resolvable:$true] %s277
          %283 = dma.hbm_to_vmem [thread:$0]  %s6, 8192, %s278, [#allocation9], 512, 512, 32
        $region36: #{tpu_custom_call.1} parent=11 // pred_fallthru
          _
        // Predicated region
        $region37: #{tpu_custom_call.1} parent=11 // pred_check
          %p284 = pneg %p195
        $region38: #{tpu_custom_call.1} parent=11 // pred_check_branch
          %286 = sbr.rel (%p284) target = $region40
        $region39: #{tpu_custom_call.1} parent=11 // pred_region
          _
        $region40: #{tpu_custom_call.1} parent=11 // pred_fallthru
          _
      $region12: #{tpu_custom_call.1} parent=5 // pred_fallthru
        _
      %p287 = scmp.lt.s32.totalorder %s22, 2
      // Predicated region
      $region41: #{tpu_custom_call.1} parent=5 // pred_check
        %p288 = pneg %p287
      $region42: #{tpu_custom_call.1} parent=5 // pred_check_branch
        %290 = sbr.rel (%p288) target = $region44
      $region43: #{tpu_custom_call.1} parent=5 // pred_region
        // Predicated region
        $region45: #{tpu_custom_call.1} parent=43 // pred_check
          %p291 = pneg %p42
        $region46: #{tpu_custom_call.1} parent=43 // pred_check_branch
          %293 = sbr.rel (%p291) target = $region48
        $region47: #{tpu_custom_call.1} parent=43 // pred_region
          %s294 = sand.u32 %s32, 1
          %s295 = scalar_lea.sflag [#allocation3], %s294
          %s296 = sand.u32 %s32, 1
          %s297 = smul.addr %s296, 64
          %s298 = scalar_lea.vmem [#allocation2], %s297
          %s300 = ssub.s32 1024, 1024
          %301 = vsyncadd %s295, %s300
          %s302 = smul.addr %s22, 16
          %s303 = smul.addr %s302, 64
          %s304 = scalar_lea.hbm %s0, %s303
          %s305 = sshll.u32 %s298, 4
          %s306 = int_to_ptr.vmem [resolvable:$true] %s305
          %311 = dma.hbm_to_vmem [thread:$0]  %s304, 1024, %s306, %s295, 512, 512, 32
        $region48: #{tpu_custom_call.1} parent=43 // pred_fallthru
          _
      $region44: #{tpu_custom_call.1} parent=5 // pred_fallthru
        _
      %p312 = scmp.le.s32.totalorder 1, %s22
      %p313 = scmp.lt.s32.totalorder %s22, 3
      %p314 = pnand %p312, %p313
      %p315 = pneg %p314
      // Predicated region
      $region49: #{tpu_custom_call.1} parent=5 // pred_check
        _
      $region50: #{tpu_custom_call.1} parent=5 // pred_check_branch
        %317 = sbr.rel (%p314) target = $region52
      $region51: #{tpu_custom_call.1} parent=5 // pred_region
        %s318 = ssub.s32 %s22, 1
        %s319 = sand.u32 %s35, 1
        %s320 = scalar_lea.sflag [#allocation3], %s319
        %s321 = sand.u32 %s35, 1
        %s322 = smul.addr %s321, 64
        %s323 = scalar_lea.vmem [#allocation2], %s322
        // Predicated region
        $region53: #{tpu_custom_call.1} parent=51 // pred_check
          %p324 = pneg %p48
        $region54: #{tpu_custom_call.1} parent=51 // pred_check_branch
          %326 = sbr.rel (%p324) target = $region56
        $region55: #{tpu_custom_call.1} parent=51 // pred_region
          %327 = dma.done %s320, 1024
        $region56: #{tpu_custom_call.1} parent=51 // pred_fallthru
          _
        // Predicated region
        $region57: #{tpu_custom_call.1} parent=51 // pred_check
          %p328 = pneg %p111
        $region58: #{tpu_custom_call.1} parent=51 // pred_check_branch
          %330 = sbr.rel (%p328) target = $region60
        $region59: #{tpu_custom_call.1} parent=51 // pred_region
          %331 = dma.done [#allocation6], 8192
        $region60: #{tpu_custom_call.1} parent=51 // pred_fallthru
          _
        // Predicated region
        $region61: #{tpu_custom_call.1} parent=51 // pred_check
          %p332 = pneg %p153
        $region62: #{tpu_custom_call.1} parent=51 // pred_check_branch
          %334 = sbr.rel (%p332) target = $region64
        $region63: #{tpu_custom_call.1} parent=51 // pred_region
          %335 = dma.done [#allocation6], 128
        $region64: #{tpu_custom_call.1} parent=51 // pred_fallthru
          _
        // Predicated region
        $region65: #{tpu_custom_call.1} parent=51 // pred_check
          %p336 = pneg %p174
        $region66: #{tpu_custom_call.1} parent=51 // pred_check_branch
          %338 = sbr.rel (%p336) target = $region68
        $region67: #{tpu_custom_call.1} parent=51 // pred_region
          %339 = dma.done [#allocation9], 8192
        $region68: #{tpu_custom_call.1} parent=51 // pred_fallthru
          _
        %s340 = sand.u32 %s35, 1
        %s341 = scalar_lea.sflag [#allocation3], %s340
        %s342 = sand.u32 %s35, 1
        %s343 = smul.addr %s342, 64
        %s344 = scalar_lea.vmem [#allocation2], %s343
        %p345 = pneg %p48
        %p346 = pneg %p45
        %p347 = pneg %p69
        %p348 = pneg %p66
        %p349 = pneg %p90
        %p350 = pneg %p87
        %p351 = pneg %p111
        %p352 = pneg %p108
        %p353 = pneg %p132
        %p354 = pneg %p129
        %p355 = pneg %p153
        %p356 = pneg %p150
        %p357 = pneg %p174
        %p358 = pneg %p171
        %p359 = pneg %p195
        %p360 = pneg %p192
        %p361 = pneg %p221
        %p362 = pneg %p218
        %s363 = sand.u32 %s208, 1
        %s364 = scalar_lea.sflag [#allocation4], %s363
        %s365 = sand.u32 %s208, 1
        %s366 = smul.addr %s365, 128
        %s367 = scalar_lea.vmem [#allocation10], %s366
        %v369 = vld [vmem:[%s1] sm:$0xf]
        %v370 = vld [vmem:[%s1 + $0x4] sm:$0xf]
        %v371 = vld [vmem:[%s2] sm:$0xf]
        %v372 = vld [vmem:[%s2 + $0x4] sm:$0xf]
        %v373 = vld [vmem:[#allocation5] sm:$0xf]
        %v374 = vld [vmem:[#allocation5 + $0x4] sm:$0xf]
        %v375 = vld [vmem:[#allocation5 + $0x8] sm:$0xf]
        %v376 = vld [vmem:[#allocation5 + $0xc] sm:$0xf]
        %v377 = vld [vmem:[#allocation5 + $0x10] sm:$0xf]
        %v378 = vld [vmem:[#allocation5 + $0x14] sm:$0xf]
        %v379 = vld [vmem:[#allocation5 + $0x18] sm:$0xf]
        %v380 = vld [vmem:[#allocation5 + $0x1c] sm:$0xf]
        %v381 = vld [vmem:[#allocation5 + $0x20] sm:$0xf]
        %v382 = vld [vmem:[#allocation5 + $0x24] sm:$0xf]
        %v383 = vld [vmem:[#allocation5 + $0x28] sm:$0xf]
        %v384 = vld [vmem:[#allocation5 + $0x2c] sm:$0xf]
        %v385 = vld [vmem:[#allocation5 + $0x30] sm:$0xf]
        %v386 = vld [vmem:[#allocation5 + $0x34] sm:$0xf]
        %v387 = vld [vmem:[#allocation5 + $0x38] sm:$0xf]
        %v388 = vld [vmem:[#allocation5 + $0x3c] sm:$0xf]
        %v389 = vld [vmem:[#allocation5 + $0x40] sm:$0xf]
        %v390 = vld [vmem:[#allocation5 + $0x44] sm:$0xf]
        %v391 = vld [vmem:[#allocation5 + $0x48] sm:$0xf]
        %v392 = vld [vmem:[#allocation5 + $0x4c] sm:$0xf]
        %v393 = vld [vmem:[#allocation5 + $0x50] sm:$0xf]
        %v394 = vld [vmem:[#allocation5 + $0x54] sm:$0xf]
        %v395 = vld [vmem:[#allocation5 + $0x58] sm:$0xf]
        %v396 = vld [vmem:[#allocation5 + $0x5c] sm:$0xf]
        %v397 = vld [vmem:[#allocation5 + $0x60] sm:$0xf]
        %v398 = vld [vmem:[#allocation5 + $0x64] sm:$0xf]
        %v399 = vld [vmem:[#allocation5 + $0x68] sm:$0xf]
        %v400 = vld [vmem:[#allocation5 + $0x6c] sm:$0xf]
        %v401 = vld [vmem:[#allocation5 + $0x70] sm:$0xf]
        %v402 = vld [vmem:[#allocation5 + $0x74] sm:$0xf]
        %v403 = vld [vmem:[#allocation5 + $0x78] sm:$0xf]
        %v404 = vld [vmem:[#allocation5 + $0x7c] sm:$0xf]
        %v405 = vld [vmem:[#allocation5 + $0x80] sm:$0xf]
        %v406 = vld [vmem:[#allocation5 + $0x84] sm:$0xf]
        %v407 = vld [vmem:[#allocation5 + $0x88] sm:$0xf]
        %v408 = vld [vmem:[#allocation5 + $0x8c] sm:$0xf]
        %v409 = vld [vmem:[#allocation5 + $0x90] sm:$0xf]
        %v410 = vld [vmem:[#allocation5 + $0x94] sm:$0xf]
        %v411 = vld [vmem:[#allocation5 + $0x98] sm:$0xf]
        %v412 = vld [vmem:[#allocation5 + $0x9c] sm:$0xf]
        %v413 = vld [vmem:[#allocation5 + $0xa0] sm:$0xf]
        %v414 = vld [vmem:[#allocation5 + $0xa4] sm:$0xf]
        %v415 = vld [vmem:[#allocation5 + $0xa8] sm:$0xf]
        %v416 = vld [vmem:[#allocation5 + $0xac] sm:$0xf]
        %v417 = vld [vmem:[#allocation5 + $0xb0] sm:$0xf]
        %v418 = vld [vmem:[#allocation5 + $0xb4] sm:$0xf]
        %v419 = vld [vmem:[#allocation5 + $0xb8] sm:$0xf]
        %v420 = vld [vmem:[#allocation5 + $0xbc] sm:$0xf]
        %v421 = vld [vmem:[#allocation5 + $0xc0] sm:$0xf]
        %v422 = vld [vmem:[#allocation5 + $0xc4] sm:$0xf]
        %v423 = vld [vmem:[#allocation5 + $0xc8] sm:$0xf]
        %v424 = vld [vmem:[#allocation5 + $0xcc] sm:$0xf]
        %v425 = vld [vmem:[#allocation5 + $0xd0] sm:$0xf]
        %v426 = vld [vmem:[#allocation5 + $0xd4] sm:$0xf]
        %v427 = vld [vmem:[#allocation5 + $0xd8] sm:$0xf]
        %v428 = vld [vmem:[#allocation5 + $0xdc] sm:$0xf]
        %v429 = vld [vmem:[#allocation5 + $0xe0] sm:$0xf]
        %v430 = vld [vmem:[#allocation5 + $0xe4] sm:$0xf]
        %v431 = vld [vmem:[#allocation5 + $0xe8] sm:$0xf]
        %v432 = vld [vmem:[#allocation5 + $0xec] sm:$0xf]
        %v433 = vld [vmem:[#allocation5 + $0xf0] sm:$0xf]
        %v434 = vld [vmem:[#allocation5 + $0xf4] sm:$0xf]
        %v435 = vld [vmem:[#allocation5 + $0xf8] sm:$0xf]
        %v436 = vld [vmem:[#allocation5 + $0xfc] sm:$0xf]
        %v437 = vld [vmem:[#allocation5 + $0x100] sm:$0xf]
        %v438 = vld [vmem:[#allocation5 + $0x104] sm:$0xf]
        %v439 = vld [vmem:[#allocation5 + $0x108] sm:$0xf]
        %v440 = vld [vmem:[#allocation5 + $0x10c] sm:$0xf]
        %v441 = vld [vmem:[#allocation5 + $0x110] sm:$0xf]
        %v442 = vld [vmem:[#allocation5 + $0x114] sm:$0xf]
        %v443 = vld [vmem:[#allocation5 + $0x118] sm:$0xf]
        %v444 = vld [vmem:[#allocation5 + $0x11c] sm:$0xf]
        %v445 = vld [vmem:[#allocation5 + $0x120] sm:$0xf]
        %v446 = vld [vmem:[#allocation5 + $0x124] sm:$0xf]
        %v447 = vld [vmem:[#allocation5 + $0x128] sm:$0xf]
        %v448 = vld [vmem:[#allocation5 + $0x12c] sm:$0xf]
        %v449 = vld [vmem:[#allocation5 + $0x130] sm:$0xf]
        %v450 = vld [vmem:[#allocation5 + $0x134] sm:$0xf]
        %v451 = vld [vmem:[#allocation5 + $0x138] sm:$0xf]
        %v452 = vld [vmem:[#allocation5 + $0x13c] sm:$0xf]
        %v453 = vld [vmem:[#allocation5 + $0x140] sm:$0xf]
        %v454 = vld [vmem:[#allocation5 + $0x144] sm:$0xf]
        %v455 = vld [vmem:[#allocation5 + $0x148] sm:$0xf]
        %v456 = vld [vmem:[#allocation5 + $0x14c] sm:$0xf]
        %v457 = vld [vmem:[#allocation5 + $0x150] sm:$0xf]
        %v458 = vld [vmem:[#allocation5 + $0x154] sm:$0xf]
        %v459 = vld [vmem:[#allocation5 + $0x158] sm:$0xf]
        %v460 = vld [vmem:[#allocation5 + $0x15c] sm:$0xf]
        %v461 = vld [vmem:[#allocation5 + $0x160] sm:$0xf]
        %v462 = vld [vmem:[#allocation5 + $0x164] sm:$0xf]
        %v463 = vld [vmem:[#allocation5 + $0x168] sm:$0xf]
        %v464 = vld [vmem:[#allocation5 + $0x16c] sm:$0xf]
        %v465 = vld [vmem:[#allocation5 + $0x170] sm:$0xf]
        %v466 = vld [vmem:[#allocation5 + $0x174] sm:$0xf]
        %v467 = vld [vmem:[#allocation5 + $0x178] sm:$0xf]
        %v468 = vld [vmem:[#allocation5 + $0x17c] sm:$0xf]
        %v469 = vld [vmem:[#allocation5 + $0x180] sm:$0xf]
        %v470 = vld [vmem:[#allocation5 + $0x184] sm:$0xf]
        %v471 = vld [vmem:[#allocation5 + $0x188] sm:$0xf]
        %v472 = vld [vmem:[#allocation5 + $0x18c] sm:$0xf]
        %v473 = vld [vmem:[#allocation5 + $0x190] sm:$0xf]
        %v474 = vld [vmem:[#allocation5 + $0x194] sm:$0xf]
        %v475 = vld [vmem:[#allocation5 + $0x198] sm:$0xf]
        %v476 = vld [vmem:[#allocation5 + $0x19c] sm:$0xf]
        %v477 = vld [vmem:[#allocation5 + $0x1a0] sm:$0xf]
        %v478 = vld [vmem:[#allocation5 + $0x1a4] sm:$0xf]
        %v479 = vld [vmem:[#allocation5 + $0x1a8] sm:$0xf]
        %v480 = vld [vmem:[#allocation5 + $0x1ac] sm:$0xf]
        %v481 = vld [vmem:[#allocation5 + $0x1b0] sm:$0xf]
        %v482 = vld [vmem:[#allocation5 + $0x1b4] sm:$0xf]
        %v483 = vld [vmem:[#allocation5 + $0x1b8] sm:$0xf]
        %v484 = vld [vmem:[#allocation5 + $0x1bc] sm:$0xf]
        %v485 = vld [vmem:[#allocation5 + $0x1c0] sm:$0xf]
        %v486 = vld [vmem:[#allocation5 + $0x1c4] sm:$0xf]
        %v487 = vld [vmem:[#allocation5 + $0x1c8] sm:$0xf]
        %v488 = vld [vmem:[#allocation5 + $0x1cc] sm:$0xf]
        %v489 = vld [vmem:[#allocation5 + $0x1d0] sm:$0xf]
        %v490 = vld [vmem:[#allocation5 + $0x1d4] sm:$0xf]
        %v491 = vld [vmem:[#allocation5 + $0x1d8] sm:$0xf]
        %v492 = vld [vmem:[#allocation5 + $0x1dc] sm:$0xf]
        %v493 = vld [vmem:[#allocation5 + $0x1e0] sm:$0xf]
        %v494 = vld [vmem:[#allocation5 + $0x1e4] sm:$0xf]
        %v495 = vld [vmem:[#allocation5 + $0x1e8] sm:$0xf]
        %v496 = vld [vmem:[#allocation5 + $0x1ec] sm:$0xf]
        %v497 = vld [vmem:[#allocation5 + $0x1f0] sm:$0xf]
        %v498 = vld [vmem:[#allocation5 + $0x1f4] sm:$0xf]
        %v499 = vld [vmem:[#allocation5 + $0x1f8] sm:$0xf]
        %v500 = vld [vmem:[#allocation5 + $0x1fc] sm:$0xf]
        %v501 = vld [vmem:[%s4] sm:$0xff]
        %v502 = vld [vmem:[%s4 + $0x8] sm:$0xff]
        %v503 = vld [vmem:[#allocation7] sm:$0xf]
        %v504 = vld [vmem:[#allocation7 + $0x4] sm:$0xf]
        %v505 = vld [vmem:[#allocation8] sm:$0xff]
        %v506 = vld [vmem:[#allocation8 + $0x8] sm:$0xff]
        %v507 = vld [vmem:[#allocation8 + $0x10] sm:$0xff]
        %v508 = vld [vmem:[#allocation8 + $0x18] sm:$0xff]
        %v509 = vld [vmem:[#allocation8 + $0x20] sm:$0xff]
        %v510 = vld [vmem:[#allocation8 + $0x28] sm:$0xff]
        %v511 = vld [vmem:[#allocation8 + $0x30] sm:$0xff]
        %v512 = vld [vmem:[#allocation8 + $0x38] sm:$0xff]
        %v513 = vld [vmem:[#allocation8 + $0x40] sm:$0xff]
        %v514 = vld [vmem:[#allocation8 + $0x48] sm:$0xff]
        %v515 = vld [vmem:[#allocation8 + $0x50] sm:$0xff]
        %v516 = vld [vmem:[#allocation8 + $0x58] sm:$0xff]
        %v517 = vld [vmem:[#allocation8 + $0x60] sm:$0xff]
        %v518 = vld [vmem:[#allocation8 + $0x68] sm:$0xff]
        %v519 = vld [vmem:[#allocation8 + $0x70] sm:$0xff]
        %v520 = vld [vmem:[#allocation8 + $0x78] sm:$0xff]
        %v521 = vld [vmem:[#allocation8 + $0x80] sm:$0xff]
        %v522 = vld [vmem:[#allocation8 + $0x88] sm:$0xff]
        %v523 = vld [vmem:[#allocation8 + $0x90] sm:$0xff]
        %v524 = vld [vmem:[#allocation8 + $0x98] sm:$0xff]
        %v525 = vld [vmem:[#allocation8 + $0xa0] sm:$0xff]
        %v526 = vld [vmem:[#allocation8 + $0xa8] sm:$0xff]
        %v527 = vld [vmem:[#allocation8 + $0xb0] sm:$0xff]
        %v528 = vld [vmem:[#allocation8 + $0xb8] sm:$0xff]
        %v529 = vld [vmem:[#allocation8 + $0xc0] sm:$0xff]
        %v530 = vld [vmem:[#allocation8 + $0xc8] sm:$0xff]
        %v531 = vld [vmem:[#allocation8 + $0xd0] sm:$0xff]
        %v532 = vld [vmem:[#allocation8 + $0xd8] sm:$0xff]
        %v533 = vld [vmem:[#allocation8 + $0xe0] sm:$0xff]
        %v534 = vld [vmem:[#allocation8 + $0xe8] sm:$0xff]
        %v535 = vld [vmem:[#allocation8 + $0xf0] sm:$0xff]
        %v536 = vld [vmem:[#allocation8 + $0xf8] sm:$0xff]
        %v537 = vld [vmem:[#allocation8 + $0x100] sm:$0xff]
        %v538 = vld [vmem:[#allocation8 + $0x108] sm:$0xff]
        %v539 = vld [vmem:[#allocation8 + $0x110] sm:$0xff]
        %v540 = vld [vmem:[#allocation8 + $0x118] sm:$0xff]
        %v541 = vld [vmem:[#allocation8 + $0x120] sm:$0xff]
        %v542 = vld [vmem:[#allocation8 + $0x128] sm:$0xff]
        %v543 = vld [vmem:[#allocation8 + $0x130] sm:$0xff]
        %v544 = vld [vmem:[#allocation8 + $0x138] sm:$0xff]
        %v545 = vld [vmem:[#allocation8 + $0x140] sm:$0xff]
        %v546 = vld [vmem:[#allocation8 + $0x148] sm:$0xff]
        %v547 = vld [vmem:[#allocation8 + $0x150] sm:$0xff]
        %v548 = vld [vmem:[#allocation8 + $0x158] sm:$0xff]
        %v549 = vld [vmem:[#allocation8 + $0x160] sm:$0xff]
        %v550 = vld [vmem:[#allocation8 + $0x168] sm:$0xff]
        %v551 = vld [vmem:[#allocation8 + $0x170] sm:$0xff]
        %v552 = vld [vmem:[#allocation8 + $0x178] sm:$0xff]
        %v553 = vld [vmem:[#allocation8 + $0x180] sm:$0xff]
        %v554 = vld [vmem:[#allocation8 + $0x188] sm:$0xff]
        %v555 = vld [vmem:[#allocation8 + $0x190] sm:$0xff]
        %v556 = vld [vmem:[#allocation8 + $0x198] sm:$0xff]
        %v557 = vld [vmem:[#allocation8 + $0x1a0] sm:$0xff]
        %v558 = vld [vmem:[#allocation8 + $0x1a8] sm:$0xff]
        %v559 = vld [vmem:[#allocation8 + $0x1b0] sm:$0xff]
        %v560 = vld [vmem:[#allocation8 + $0x1b8] sm:$0xff]
        %v561 = vld [vmem:[#allocation8 + $0x1c0] sm:$0xff]
        %v562 = vld [vmem:[#allocation8 + $0x1c8] sm:$0xff]
        %v563 = vld [vmem:[#allocation8 + $0x1d0] sm:$0xff]
        %v564 = vld [vmem:[#allocation8 + $0x1d8] sm:$0xff]
        %v565 = vld [vmem:[#allocation8 + $0x1e0] sm:$0xff]
        %v566 = vld [vmem:[#allocation8 + $0x1e8] sm:$0xff]
        %v567 = vld [vmem:[#allocation8 + $0x1f0] sm:$0xff]
        %v568 = vld [vmem:[#allocation8 + $0x1f8] sm:$0xff]
        %v569 = vld [vmem:[%s7] sm:$0xff]
        %v570 = vld [vmem:[%s7 + $0x8] sm:$0xff]
        %572 = vset.pattern.permute.xlu0 0
        %573 = vperm.xlu0 %572, %v569
        %v574 = vpop.permute.xlu0 %573
        %577 = vset.pattern.permute.xlu0 0
        %578 = vperm.xlu0 %577, %v570
        %v579 = vpop.permute.xlu0 %578
        %v581 = vld [vmem:[%s323] sm:$0xff]
        %v582 = vld [vmem:[%s323 + $0x8] sm:$0xff]
        %v583 = vld [vmem:[%s323 + $0x10] sm:$0xff]
        %v584 = vld [vmem:[%s323 + $0x18] sm:$0xff]
        %v585 = vld [vmem:[%s323 + $0x20] sm:$0xff]
        %v586 = vld [vmem:[%s323 + $0x28] sm:$0xff]
        %v587 = vld [vmem:[%s323 + $0x30] sm:$0xff]
        %v588 = vld [vmem:[%s323 + $0x38] sm:$0xff]
        %v597 = vunpack.c.l.b16 %v581
        %v598 = vunpack.c.h.b16 %v581
        %v599 = vunpack.c.l.b16 %v582
        %v600 = vunpack.c.h.b16 %v582
        %v601 = vunpack.c.l.b16 %v583
        %v602 = vunpack.c.h.b16 %v583
        %v603 = vunpack.c.l.b16 %v584
        %v604 = vunpack.c.h.b16 %v584
        %v605 = vunpack.c.l.b16 %v585
        %v606 = vunpack.c.h.b16 %v585
        %v607 = vunpack.c.l.b16 %v586
        %v608 = vunpack.c.h.b16 %v586
        %v609 = vunpack.c.l.b16 %v587
        %v610 = vunpack.c.h.b16 %v587
        %v611 = vunpack.c.l.b16 %v588
        %v612 = vunpack.c.h.b16 %v588
        %v613 = vpack.c.b16 %v605, %v597
        %v614 = vpack.c.b16 %v606, %v598
        %v615 = vpack.c.b16 %v607, %v599
        %v616 = vpack.c.b16 %v608, %v600
        %v617 = vpack.c.b16 %v609, %v601
        %v618 = vpack.c.b16 %v610, %v602
        %v619 = vpack.c.b16 %v611, %v603
        %v620 = vpack.c.b16 %v612, %v604
        %v757 = vunpack.c.l.b16 %v373
        %v758 = vunpack.c.l.b16 %v374
        %v759 = vunpack.c.l.b16 %v375
        %v760 = vunpack.c.l.b16 %v376
        %v761 = vunpack.c.l.b16 %v377
        %v762 = vunpack.c.l.b16 %v378
        %v763 = vunpack.c.l.b16 %v379
        %v764 = vunpack.c.l.b16 %v380
        %v765 = vunpack.c.l.b16 %v381
        %v766 = vunpack.c.l.b16 %v382
        %v767 = vunpack.c.l.b16 %v383
        %v768 = vunpack.c.l.b16 %v384
        %v769 = vunpack.c.l.b16 %v385
        %v770 = vunpack.c.l.b16 %v386
        %v771 = vunpack.c.l.b16 %v387
        %v772 = vunpack.c.l.b16 %v388
        %v773 = vunpack.c.l.b16 %v389
        %v774 = vunpack.c.l.b16 %v390
        %v775 = vunpack.c.l.b16 %v391
        %v776 = vunpack.c.l.b16 %v392
        %v777 = vunpack.c.l.b16 %v393
        %v778 = vunpack.c.l.b16 %v394
        %v779 = vunpack.c.l.b16 %v395
        %v780 = vunpack.c.l.b16 %v396
        %v781 = vunpack.c.l.b16 %v397
        %v782 = vunpack.c.l.b16 %v398
        %v783 = vunpack.c.l.b16 %v399
        %v784 = vunpack.c.l.b16 %v400
        %v785 = vunpack.c.l.b16 %v401
        %v786 = vunpack.c.l.b16 %v402
        %v787 = vunpack.c.l.b16 %v403
        %v788 = vunpack.c.l.b16 %v404
        %v789 = vunpack.c.l.b16 %v405
        %v790 = vunpack.c.l.b16 %v406
        %v791 = vunpack.c.l.b16 %v407
        %v792 = vunpack.c.l.b16 %v408
        %v793 = vunpack.c.l.b16 %v409
        %v794 = vunpack.c.l.b16 %v410
        %v795 = vunpack.c.l.b16 %v411
        %v796 = vunpack.c.l.b16 %v412
        %v797 = vunpack.c.l.b16 %v413
        %v798 = vunpack.c.l.b16 %v414
        %v799 = vunpack.c.l.b16 %v415
        %v800 = vunpack.c.l.b16 %v416
        %v801 = vunpack.c.l.b16 %v417
        %v802 = vunpack.c.l.b16 %v418
        %v803 = vunpack.c.l.b16 %v419
        %v804 = vunpack.c.l.b16 %v420
        %v805 = vunpack.c.l.b16 %v421
        %v806 = vunpack.c.l.b16 %v422
        %v807 = vunpack.c.l.b16 %v423
        %v808 = vunpack.c.l.b16 %v424
        %v809 = vunpack.c.l.b16 %v425
        %v810 = vunpack.c.l.b16 %v426
        %v811 = vunpack.c.l.b16 %v427
        %v812 = vunpack.c.l.b16 %v428
        %v813 = vunpack.c.l.b16 %v429
        %v814 = vunpack.c.l.b16 %v430
        %v815 = vunpack.c.l.b16 %v431
        %v816 = vunpack.c.l.b16 %v432
        %v817 = vunpack.c.l.b16 %v433
        %v818 = vunpack.c.l.b16 %v434
        %v819 = vunpack.c.l.b16 %v435
        %v820 = vunpack.c.l.b16 %v436
        %v821 = vunpack.c.l.b16 %v437
        %v822 = vunpack.c.l.b16 %v438
        %v823 = vunpack.c.l.b16 %v439
        %v824 = vunpack.c.l.b16 %v440
        %v825 = vunpack.c.l.b16 %v441
        %v826 = vunpack.c.l.b16 %v442
        %v827 = vunpack.c.l.b16 %v443
        %v828 = vunpack.c.l.b16 %v444
        %v829 = vunpack.c.l.b16 %v445
        %v830 = vunpack.c.l.b16 %v446
        %v831 = vunpack.c.l.b16 %v447
        %v832 = vunpack.c.l.b16 %v448
        %v833 = vunpack.c.l.b16 %v449
        %v834 = vunpack.c.l.b16 %v450
        %v835 = vunpack.c.l.b16 %v451
        %v836 = vunpack.c.l.b16 %v452
        %v837 = vunpack.c.l.b16 %v453
        %v838 = vunpack.c.l.b16 %v454
        %v839 = vunpack.c.l.b16 %v455
        %v840 = vunpack.c.l.b16 %v456
        %v841 = vunpack.c.l.b16 %v457
        %v842 = vunpack.c.l.b16 %v458
        %v843 = vunpack.c.l.b16 %v459
        %v844 = vunpack.c.l.b16 %v460
        %v845 = vunpack.c.l.b16 %v461
        %v846 = vunpack.c.l.b16 %v462
        %v847 = vunpack.c.l.b16 %v463
        %v848 = vunpack.c.l.b16 %v464
        %v849 = vunpack.c.l.b16 %v465
        %v850 = vunpack.c.l.b16 %v466
        %v851 = vunpack.c.l.b16 %v467
        %v852 = vunpack.c.l.b16 %v468
        %v853 = vunpack.c.l.b16 %v469
        %v854 = vunpack.c.l.b16 %v470
        %v855 = vunpack.c.l.b16 %v471
        %v856 = vunpack.c.l.b16 %v472
        %v857 = vunpack.c.l.b16 %v473
        %v858 = vunpack.c.l.b16 %v474
        %v859 = vunpack.c.l.b16 %v475
        %v860 = vunpack.c.l.b16 %v476
        %v861 = vunpack.c.l.b16 %v477
        %v862 = vunpack.c.l.b16 %v478
        %v863 = vunpack.c.l.b16 %v479
        %v864 = vunpack.c.l.b16 %v480
        %v865 = vunpack.c.l.b16 %v481
        %v866 = vunpack.c.l.b16 %v482
        %v867 = vunpack.c.l.b16 %v483
        %v868 = vunpack.c.l.b16 %v484
        %v869 = vunpack.c.l.b16 %v485
        %v870 = vunpack.c.l.b16 %v486
        %v871 = vunpack.c.l.b16 %v487
        %v872 = vunpack.c.l.b16 %v488
        %v873 = vunpack.c.l.b16 %v489
        %v874 = vunpack.c.l.b16 %v490
        %v875 = vunpack.c.l.b16 %v491
        %v876 = vunpack.c.l.b16 %v492
        %v877 = vunpack.c.l.b16 %v493
        %v878 = vunpack.c.l.b16 %v494
        %v879 = vunpack.c.l.b16 %v495
        %v880 = vunpack.c.l.b16 %v496
        %v881 = vunpack.c.l.b16 %v497
        %v882 = vunpack.c.l.b16 %v498
        %v883 = vunpack.c.l.b16 %v499
        %v884 = vunpack.c.l.b16 %v500
        %v885 = vpack.c.b16 %v758, %v757
        %v886 = vpack.c.b16 %v760, %v759
        %v887 = vpack.c.b16 %v762, %v761
        %v888 = vpack.c.b16 %v764, %v763
        %v889 = vpack.c.b16 %v766, %v765
        %v890 = vpack.c.b16 %v768, %v767
        %v891 = vpack.c.b16 %v770, %v769
        %v892 = vpack.c.b16 %v772, %v771
        %v893 = vpack.c.b16 %v774, %v773
        %v894 = vpack.c.b16 %v776, %v775
        %v895 = vpack.c.b16 %v778, %v777
        %v896 = vpack.c.b16 %v780, %v779
        %v897 = vpack.c.b16 %v782, %v781
        %v898 = vpack.c.b16 %v784, %v783
        %v899 = vpack.c.b16 %v786, %v785
        %v900 = vpack.c.b16 %v788, %v787
        %v901 = vpack.c.b16 %v790, %v789
        %v902 = vpack.c.b16 %v792, %v791
        %v903 = vpack.c.b16 %v794, %v793
        %v904 = vpack.c.b16 %v796, %v795
        %v905 = vpack.c.b16 %v798, %v797
        %v906 = vpack.c.b16 %v800, %v799
        %v907 = vpack.c.b16 %v802, %v801
        %v908 = vpack.c.b16 %v804, %v803
        %v909 = vpack.c.b16 %v806, %v805
        %v910 = vpack.c.b16 %v808, %v807
        %v911 = vpack.c.b16 %v810, %v809
        %v912 = vpack.c.b16 %v812, %v811
        %v913 = vpack.c.b16 %v814, %v813
        %v914 = vpack.c.b16 %v816, %v815
        %v915 = vpack.c.b16 %v818, %v817
        %v916 = vpack.c.b16 %v820, %v819
        %v917 = vpack.c.b16 %v822, %v821
        %v918 = vpack.c.b16 %v824, %v823
        %v919 = vpack.c.b16 %v826, %v825
        %v920 = vpack.c.b16 %v828, %v827
        %v921 = vpack.c.b16 %v830, %v829
        %v922 = vpack.c.b16 %v832, %v831
        %v923 = vpack.c.b16 %v834, %v833
        %v924 = vpack.c.b16 %v836, %v835
        %v925 = vpack.c.b16 %v838, %v837
        %v926 = vpack.c.b16 %v840, %v839
        %v927 = vpack.c.b16 %v842, %v841
        %v928 = vpack.c.b16 %v844, %v843
        %v929 = vpack.c.b16 %v846, %v845
        %v930 = vpack.c.b16 %v848, %v847
        %v931 = vpack.c.b16 %v850, %v849
        %v932 = vpack.c.b16 %v852, %v851
        %v933 = vpack.c.b16 %v854, %v853
        %v934 = vpack.c.b16 %v856, %v855
        %v935 = vpack.c.b16 %v858, %v857
        %v936 = vpack.c.b16 %v860, %v859
        %v937 = vpack.c.b16 %v862, %v861
        %v938 = vpack.c.b16 %v864, %v863
        %v939 = vpack.c.b16 %v866, %v865
        %v940 = vpack.c.b16 %v868, %v867
        %v941 = vpack.c.b16 %v870, %v869
        %v942 = vpack.c.b16 %v872, %v871
        %v943 = vpack.c.b16 %v874, %v873
        %v944 = vpack.c.b16 %v876, %v875
        %v945 = vpack.c.b16 %v878, %v877
        %v946 = vpack.c.b16 %v880, %v879
        %v947 = vpack.c.b16 %v882, %v881
        %v948 = vpack.c.b16 %v884, %v883
        %1013 = vmatprep.subr.bf16.mxu0 0
        %1014 = vmatpush1.bf16.msra.mxu0 %v885
        %1015 = vmatprep.subr.bf16.mxu0 0
        %1016 = vmatpush1.bf16.msra.mxu0 %v886
        %1017 = vmatprep.subr.bf16.mxu0 0
        %1018 = vmatpush1.bf16.msra.mxu0 %v887
        %1019 = vmatprep.subr.bf16.mxu0 0
        %1020 = vmatpush1.bf16.msra.mxu0 %v888
        %1021 = vmatprep.subr.bf16.mxu0 0
        %1022 = vmatpush1.bf16.msra.mxu0 %v889
        %1023 = vmatprep.subr.bf16.mxu0 0
        %1024 = vmatpush1.bf16.msra.mxu0 %v890
        %1025 = vmatprep.subr.bf16.mxu0 0
        %1026 = vmatpush1.bf16.msra.mxu0 %v891
        %1027 = vmatprep.subr.bf16.mxu0 0
        %1028 = vmatpush1.bf16.msra.mxu0 %v892
        %1029 = vmatprep.subr.bf16.mxu0 0
        %1030 = vmatpush1.bf16.msra.mxu0 %v893
        %1031 = vmatprep.subr.bf16.mxu0 0
        %1032 = vmatpush1.bf16.msra.mxu0 %v894
        %1033 = vmatprep.subr.bf16.mxu0 0
        %1034 = vmatpush1.bf16.msra.mxu0 %v895
        %1035 = vmatprep.subr.bf16.mxu0 0
        %1036 = vmatpush1.bf16.msra.mxu0 %v896
        %1037 = vmatprep.subr.bf16.mxu0 0
        %1038 = vmatpush1.bf16.msra.mxu0 %v897
        %1039 = vmatprep.subr.bf16.mxu0 0
        %1040 = vmatpush1.bf16.msra.mxu0 %v898
        %1041 = vmatprep.subr.bf16.mxu0 0
        %1042 = vmatpush1.bf16.msra.mxu0 %v899
        %1043 = vmatprep.subr.bf16.mxu0 0
        %1044 = vmatpush1.bf16.msra.mxu0 %v900
        %1045 = vmatprep.mubr.bf16.mxu0 %v614
        %1046 = vmatmul.mubr.bf16.gmra.mrb[0].mxu0 %v613
        %v1047 = vpop.f32.mrb[0].mxu0
        %v1048 = vadd.f32 0.0, %v1047
        %v1049 = vpop.f32.mrb[0].mxu0
        %v1050 = vpop.f32.mrb[0].mxu0
        %v1051 = vadd.f32 0.0, %v1050
        %v1052 = vpop.f32.mrb[0].mxu0
        %1053 = vdwg.mxu0
        %1054 = vmatprep.subr.bf16.mxu0 0
        %1055 = vmatpush1.bf16.msra.mxu0 %v901
        %1056 = vmatprep.subr.bf16.mxu0 0
        %1057 = vmatpush1.bf16.msra.mxu0 %v902
        %1058 = vmatprep.subr.bf16.mxu0 0
        %1059 = vmatpush1.bf16.msra.mxu0 %v903
        %1060 = vmatprep.subr.bf16.mxu0 0
        %1061 = vmatpush1.bf16.msra.mxu0 %v904
        %1062 = vmatprep.subr.bf16.mxu0 0
        %1063 = vmatpush1.bf16.msra.mxu0 %v905
        %1064 = vmatprep.subr.bf16.mxu0 0
        %1065 = vmatpush1.bf16.msra.mxu0 %v906
        %1066 = vmatprep.subr.bf16.mxu0 0
        %1067 = vmatpush1.bf16.msra.mxu0 %v907
        %1068 = vmatprep.subr.bf16.mxu0 0
        %1069 = vmatpush1.bf16.msra.mxu0 %v908
        %1070 = vmatprep.subr.bf16.mxu0 0
        %1071 = vmatpush1.bf16.msra.mxu0 %v909
        %1072 = vmatprep.subr.bf16.mxu0 0
        %1073 = vmatpush1.bf16.msra.mxu0 %v910
        %1074 = vmatprep.subr.bf16.mxu0 0
        %1075 = vmatpush1.bf16.msra.mxu0 %v911
        %1076 = vmatprep.subr.bf16.mxu0 0
        %1077 = vmatpush1.bf16.msra.mxu0 %v912
        %1078 = vmatprep.subr.bf16.mxu0 0
        %1079 = vmatpush1.bf16.msra.mxu0 %v913
        %1080 = vmatprep.subr.bf16.mxu0 0
        %1081 = vmatpush1.bf16.msra.mxu0 %v914
        %1082 = vmatprep.subr.bf16.mxu0 0
        %1083 = vmatpush1.bf16.msra.mxu0 %v915
        %1084 = vmatprep.subr.bf16.mxu0 0
        %1085 = vmatpush1.bf16.msra.mxu0 %v916
        %1086 = vmatprep.mubr.bf16.mxu0 %v616
        %1087 = vmatmul.mubr.bf16.gmra.mrb[0].mxu0 %v615
        %v1088 = vpop.f32.mrb[0].mxu0
        %v1089 = vadd.f32 %v1048, %v1088
        %v1090 = vpop.f32.mrb[0].mxu0
        %v1091 = vpop.f32.mrb[0].mxu0
        %v1092 = vadd.f32 %v1051, %v1091
        %v1093 = vpop.f32.mrb[0].mxu0
        %1094 = vdwg.mxu0
        %1095 = vmatprep.subr.bf16.mxu0 0
        %1096 = vmatpush1.bf16.msra.mxu0 %v917
        %1097 = vmatprep.subr.bf16.mxu0 0
        %1098 = vmatpush1.bf16.msra.mxu0 %v918
        %1099 = vmatprep.subr.bf16.mxu0 0
        %1100 = vmatpush1.bf16.msra.mxu0 %v919
        %1101 = vmatprep.subr.bf16.mxu0 0
        %1102 = vmatpush1.bf16.msra.mxu0 %v920
        %1103 = vmatprep.subr.bf16.mxu0 0
        %1104 = vmatpush1.bf16.msra.mxu0 %v921
        %1105 = vmatprep.subr.bf16.mxu0 0
        %1106 = vmatpush1.bf16.msra.mxu0 %v922
        %1107 = vmatprep.subr.bf16.mxu0 0
        %1108 = vmatpush1.bf16.msra.mxu0 %v923
        %1109 = vmatprep.subr.bf16.mxu0 0
        %1110 = vmatpush1.bf16.msra.mxu0 %v924
        %1111 = vmatprep.subr.bf16.mxu0 0
        %1112 = vmatpush1.bf16.msra.mxu0 %v925
        %1113 = vmatprep.subr.bf16.mxu0 0
        %1114 = vmatpush1.bf16.msra.mxu0 %v926
        %1115 = vmatprep.subr.bf16.mxu0 0
        %1116 = vmatpush1.bf16.msra.mxu0 %v927
        %1117 = vmatprep.subr.bf16.mxu0 0
        %1118 = vmatpush1.bf16.msra.mxu0 %v928
        %1119 = vmatprep.subr.bf16.mxu0 0
        %1120 = vmatpush1.bf16.msra.mxu0 %v929
        %1121 = vmatprep.subr.bf16.mxu0 0
        %1122 = vmatpush1.bf16.msra.mxu0 %v930
        %1123 = vmatprep.subr.bf16.mxu0 0
        %1124 = vmatpush1.bf16.msra.mxu0 %v931
        %1125 = vmatprep.subr.bf16.mxu0 0
        %1126 = vmatpush1.bf16.msra.mxu0 %v932
        %1127 = vmatprep.mubr.bf16.mxu0 %v618
        %1128 = vmatmul.mubr.bf16.gmra.mrb[0].mxu0 %v617
        %v1129 = vpop.f32.mrb[0].mxu0
        %v1130 = vadd.f32 %v1089, %v1129
        %v1131 = vpop.f32.mrb[0].mxu0
        %v1132 = vpop.f32.mrb[0].mxu0
        %v1133 = vadd.f32 %v1092, %v1132
        %v1134 = vpop.f32.mrb[0].mxu0
        %1135 = vdwg.mxu0
        %1136 = vmatprep.subr.bf16.mxu0 0
        %1137 = vmatpush1.bf16.msra.mxu0 %v933
        %1138 = vmatprep.subr.bf16.mxu0 0
        %1139 = vmatpush1.bf16.msra.mxu0 %v934
        %1140 = vmatprep.subr.bf16.mxu0 0
        %1141 = vmatpush1.bf16.msra.mxu0 %v935
        %1142 = vmatprep.subr.bf16.mxu0 0
        %1143 = vmatpush1.bf16.msra.mxu0 %v936
        %1144 = vmatprep.subr.bf16.mxu0 0
        %1145 = vmatpush1.bf16.msra.mxu0 %v937
        %1146 = vmatprep.subr.bf16.mxu0 0
        %1147 = vmatpush1.bf16.msra.mxu0 %v938
        %1148 = vmatprep.subr.bf16.mxu0 0
        %1149 = vmatpush1.bf16.msra.mxu0 %v939
        %1150 = vmatprep.subr.bf16.mxu0 0
        %1151 = vmatpush1.bf16.msra.mxu0 %v940
        %1152 = vmatprep.subr.bf16.mxu0 0
        %1153 = vmatpush1.bf16.msra.mxu0 %v941
        %1154 = vmatprep.subr.bf16.mxu0 0
        %1155 = vmatpush1.bf16.msra.mxu0 %v942
        %1156 = vmatprep.subr.bf16.mxu0 0
        %1157 = vmatpush1.bf16.msra.mxu0 %v943
        %1158 = vmatprep.subr.bf16.mxu0 0
        %1159 = vmatpush1.bf16.msra.mxu0 %v944
        %1160 = vmatprep.subr.bf16.mxu0 0
        %1161 = vmatpush1.bf16.msra.mxu0 %v945
        %1162 = vmatprep.subr.bf16.mxu0 0
        %1163 = vmatpush1.bf16.msra.mxu0 %v946
        %1164 = vmatprep.subr.bf16.mxu0 0
        %1165 = vmatpush1.bf16.msra.mxu0 %v947
        %1166 = vmatprep.subr.bf16.mxu0 0
        %1167 = vmatpush1.bf16.msra.mxu0 %v948
        %1168 = vmatprep.mubr.bf16.mxu0 %v620
        %1169 = vmatmul.mubr.bf16.gmra.mrb[0].mxu0 %v619
        %v1170 = vpop.f32.mrb[0].mxu0
        %v1171 = vadd.f32 %v1130, %v1170
        %v1172 = vpop.f32.mrb[0].mxu0
        %v1173 = vpop.f32.mrb[0].mxu0
        %v1174 = vadd.f32 %v1133, %v1173
        %v1175 = vpop.f32.mrb[0].mxu0
        %1176 = vdwg.mxu0
        %v1177 = vpack.c.bf16 %v1174, %v1171
        %v1180 = vunpack.c.l.b16 %v371
        %v1181 = vunpack.c.l.b16 %v372
        %v1182 = vpack.c.b16 %v1181, %v1180
        %vm1183 = vcmask 130048
        %v1185 = vsel %vm1183, %v1182, 0
        %1187 = vmatprep.subr.bf16.mxu0 0
        %1188 = vmatpush1.bf16.msra.mxu0 %v1177
        %1189 = vmatprep.subr.bf16.mxu0 0
        %1190 = vmatpush1.bf16.msra.mxu0 0
        %1191 = vmatprep.subr.bf16.mxu0 0
        %1192 = vmatpush1.bf16.msra.mxu0 0
        %1193 = vmatprep.subr.bf16.mxu0 0
        %1194 = vmatpush1.bf16.msra.mxu0 0
        %1195 = vmatprep.subr.bf16.mxu0 0
        %1196 = vmatpush1.bf16.msra.mxu0 0
        %1197 = vmatprep.subr.bf16.mxu0 0
        %1198 = vmatpush1.bf16.msra.mxu0 0
        %1199 = vmatprep.subr.bf16.mxu0 0
        %1200 = vmatpush1.bf16.msra.mxu0 0
        %1201 = vmatprep.subr.bf16.mxu0 0
        %1202 = vmatpush1.bf16.msra.mxu0 0
        %1203 = vmatprep.subr.bf16.mxu0 0
        %1204 = vmatpush1.bf16.msra.mxu0 0
        %1205 = vmatprep.subr.bf16.mxu0 0
        %1206 = vmatpush1.bf16.msra.mxu0 0
        %1207 = vmatprep.subr.bf16.mxu0 0
        %1208 = vmatpush1.bf16.msra.mxu0 0
        %1209 = vmatprep.subr.bf16.mxu0 0
        %1210 = vmatpush1.bf16.msra.mxu0 0
        %1211 = vmatprep.subr.bf16.mxu0 0
        %1212 = vmatpush1.bf16.msra.mxu0 0
        %1213 = vmatprep.subr.bf16.mxu0 0
        %1214 = vmatpush1.bf16.msra.mxu0 0
        %1215 = vmatprep.subr.bf16.mxu0 0
        %1216 = vmatpush1.bf16.msra.mxu0 0
        %1217 = vmatprep.subr.bf16.mxu0 0
        %1218 = vmatpush1.bf16.msra.mxu0 0
        %1219 = vmatprep.mubr.bf16.mxu0 0
        %1220 = vmatmul.mubr.bf16.gmra.mrb[0].mxu0 %v1185
        %v1221 = vpop.f32.mrb[0].mxu0
        %v1222 = vadd.f32 %v501, %v1221
        %v1223 = vpop.f32.mrb[0].mxu0
        %v1224 = vpop.f32.mrb[0].mxu0
        %v1225 = vadd.f32 %v502, %v1224
        %v1226 = vpop.f32.mrb[0].mxu0
        %1227 = vdwg.mxu0
        %v1228 = vmax.f32 %v1222, 0.0
        %v1229 = vmax.f32 %v1225, 0.0
        %v1230 = vpack.c.bf16 %v1229, %v1228
        %v1233 = vunpack.c.l.b16 %v503
        %v1234 = vunpack.c.l.b16 %v504
        %v1235 = vpack.c.b16 %v1234, %v1233
        %v1237 = vsel %vm1183, %v1235, 0
        %1239 = vmatprep.subr.bf16.mxu0 0
        %1240 = vmatpush1.bf16.msra.mxu0 %v1230
        %1241 = vmatprep.subr.bf16.mxu0 0
        %1242 = vmatpush1.bf16.msra.mxu0 0
        %1243 = vmatprep.subr.bf16.mxu0 0
        %1244 = vmatpush1.bf16.msra.mxu0 0
        %1245 = vmatprep.subr.bf16.mxu0 0
        %1246 = vmatpush1.bf16.msra.mxu0 0
        %1247 = vmatprep.subr.bf16.mxu0 0
        %1248 = vmatpush1.bf16.msra.mxu0 0
        %1249 = vmatprep.subr.bf16.mxu0 0
        %1250 = vmatpush1.bf16.msra.mxu0 0
        %1251 = vmatprep.subr.bf16.mxu0 0
        %1252 = vmatpush1.bf16.msra.mxu0 0
        %1253 = vmatprep.subr.bf16.mxu0 0
        %1254 = vmatpush1.bf16.msra.mxu0 0
        %1255 = vmatprep.subr.bf16.mxu0 0
        %1256 = vmatpush1.bf16.msra.mxu0 0
        %1257 = vmatprep.subr.bf16.mxu0 0
        %1258 = vmatpush1.bf16.msra.mxu0 0
        %1259 = vmatprep.subr.bf16.mxu0 0
        %1260 = vmatpush1.bf16.msra.mxu0 0
        %1261 = vmatprep.subr.bf16.mxu0 0
        %1262 = vmatpush1.bf16.msra.mxu0 0
        %1263 = vmatprep.subr.bf16.mxu0 0
        %1264 = vmatpush1.bf16.msra.mxu0 0
        %1265 = vmatprep.subr.bf16.mxu0 0
        %1266 = vmatpush1.bf16.msra.mxu0 0
        %1267 = vmatprep.subr.bf16.mxu0 0
        %1268 = vmatpush1.bf16.msra.mxu0 0
        %1269 = vmatprep.subr.bf16.mxu0 0
        %1270 = vmatpush1.bf16.msra.mxu0 0
        %1271 = vmatprep.mubr.bf16.mxu0 0
        %1272 = vmatmul.mubr.bf16.gmra.mrb[0].mxu0 %v1237
        %v1273 = vpop.f32.mrb[0].mxu0
        %v1274 = vadd.f32 0.0, %v1273
        %v1275 = vpop.f32.mrb[0].mxu0
        %v1276 = vpop.f32.mrb[0].mxu0
        %v1277 = vadd.f32 0.0, %v1276
        %v1278 = vpop.f32.mrb[0].mxu0
        %1279 = vdwg.mxu0
        %v1280 = vpack.c.bf16 %v1277, %v1274
        %v1345 = vunpack.c.l.b16 %v505
        %v1346 = vunpack.c.h.b16 %v505
        %v1347 = vunpack.c.l.b16 %v506
        %v1348 = vunpack.c.h.b16 %v506
        %v1349 = vunpack.c.l.b16 %v507
        %v1350 = vunpack.c.h.b16 %v507
        %v1351 = vunpack.c.l.b16 %v508
        %v1352 = vunpack.c.h.b16 %v508
        %v1353 = vunpack.c.l.b16 %v509
        %v1354 = vunpack.c.h.b16 %v509
        %v1355 = vunpack.c.l.b16 %v510
        %v1356 = vunpack.c.h.b16 %v510
        %v1357 = vunpack.c.l.b16 %v511
        %v1358 = vunpack.c.h.b16 %v511
        %v1359 = vunpack.c.l.b16 %v512
        %v1360 = vunpack.c.h.b16 %v512
        %v1361 = vunpack.c.l.b16 %v513
        %v1362 = vunpack.c.h.b16 %v513
        %v1363 = vunpack.c.l.b16 %v514
        %v1364 = vunpack.c.h.b16 %v514
        %v1365 = vunpack.c.l.b16 %v515
        %v1366 = vunpack.c.h.b16 %v515
        %v1367 = vunpack.c.l.b16 %v516
        %v1368 = vunpack.c.h.b16 %v516
        %v1369 = vunpack.c.l.b16 %v517
        %v1370 = vunpack.c.h.b16 %v517
        %v1371 = vunpack.c.l.b16 %v518
        %v1372 = vunpack.c.h.b16 %v518
        %v1373 = vunpack.c.l.b16 %v519
        %v1374 = vunpack.c.h.b16 %v519
        %v1375 = vunpack.c.l.b16 %v520
        %v1376 = vunpack.c.h.b16 %v520
        %v1377 = vunpack.c.l.b16 %v521
        %v1378 = vunpack.c.h.b16 %v521
        %v1379 = vunpack.c.l.b16 %v522
        %v1380 = vunpack.c.h.b16 %v522
        %v1381 = vunpack.c.l.b16 %v523
        %v1382 = vunpack.c.h.b16 %v523
        %v1383 = vunpack.c.l.b16 %v524
        %v1384 = vunpack.c.h.b16 %v524
        %v1385 = vunpack.c.l.b16 %v525
        %v1386 = vunpack.c.h.b16 %v525
        %v1387 = vunpack.c.l.b16 %v526
        %v1388 = vunpack.c.h.b16 %v526
        %v1389 = vunpack.c.l.b16 %v527
        %v1390 = vunpack.c.h.b16 %v527
        %v1391 = vunpack.c.l.b16 %v528
        %v1392 = vunpack.c.h.b16 %v528
        %v1393 = vunpack.c.l.b16 %v529
        %v1394 = vunpack.c.h.b16 %v529
        %v1395 = vunpack.c.l.b16 %v530
        %v1396 = vunpack.c.h.b16 %v530
        %v1397 = vunpack.c.l.b16 %v531
        %v1398 = vunpack.c.h.b16 %v531
        %v1399 = vunpack.c.l.b16 %v532
        %v1400 = vunpack.c.h.b16 %v532
        %v1401 = vunpack.c.l.b16 %v533
        %v1402 = vunpack.c.h.b16 %v533
        %v1403 = vunpack.c.l.b16 %v534
        %v1404 = vunpack.c.h.b16 %v534
        %v1405 = vunpack.c.l.b16 %v535
        %v1406 = vunpack.c.h.b16 %v535
        %v1407 = vunpack.c.l.b16 %v536
        %v1408 = vunpack.c.h.b16 %v536
        %v1409 = vunpack.c.l.b16 %v537
        %v1410 = vunpack.c.h.b16 %v537
        %v1411 = vunpack.c.l.b16 %v538
        %v1412 = vunpack.c.h.b16 %v538
        %v1413 = vunpack.c.l.b16 %v539
        %v1414 = vunpack.c.h.b16 %v539
        %v1415 = vunpack.c.l.b16 %v540
        %v1416 = vunpack.c.h.b16 %v540
        %v1417 = vunpack.c.l.b16 %v541
        %v1418 = vunpack.c.h.b16 %v541
        %v1419 = vunpack.c.l.b16 %v542
        %v1420 = vunpack.c.h.b16 %v542
        %v1421 = vunpack.c.l.b16 %v543
        %v1422 = vunpack.c.h.b16 %v543
        %v1423 = vunpack.c.l.b16 %v544
        %v1424 = vunpack.c.h.b16 %v544
        %v1425 = vunpack.c.l.b16 %v545
        %v1426 = vunpack.c.h.b16 %v545
        %v1427 = vunpack.c.l.b16 %v546
        %v1428 = vunpack.c.h.b16 %v546
        %v1429 = vunpack.c.l.b16 %v547
        %v1430 = vunpack.c.h.b16 %v547
        %v1431 = vunpack.c.l.b16 %v548
        %v1432 = vunpack.c.h.b16 %v548
        %v1433 = vunpack.c.l.b16 %v549
        %v1434 = vunpack.c.h.b16 %v549
        %v1435 = vunpack.c.l.b16 %v550
        %v1436 = vunpack.c.h.b16 %v550
        %v1437 = vunpack.c.l.b16 %v551
        %v1438 = vunpack.c.h.b16 %v551
        %v1439 = vunpack.c.l.b16 %v552
        %v1440 = vunpack.c.h.b16 %v552
        %v1441 = vunpack.c.l.b16 %v553
        %v1442 = vunpack.c.h.b16 %v553
        %v1443 = vunpack.c.l.b16 %v554
        %v1444 = vunpack.c.h.b16 %v554
        %v1445 = vunpack.c.l.b16 %v555
        %v1446 = vunpack.c.h.b16 %v555
        %v1447 = vunpack.c.l.b16 %v556
        %v1448 = vunpack.c.h.b16 %v556
        %v1449 = vunpack.c.l.b16 %v557
        %v1450 = vunpack.c.h.b16 %v557
        %v1451 = vunpack.c.l.b16 %v558
        %v1452 = vunpack.c.h.b16 %v558
        %v1453 = vunpack.c.l.b16 %v559
        %v1454 = vunpack.c.h.b16 %v559
        %v1455 = vunpack.c.l.b16 %v560
        %v1456 = vunpack.c.h.b16 %v560
        %v1457 = vunpack.c.l.b16 %v561
        %v1458 = vunpack.c.h.b16 %v561
        %v1459 = vunpack.c.l.b16 %v562
        %v1460 = vunpack.c.h.b16 %v562
        %v1461 = vunpack.c.l.b16 %v563
        %v1462 = vunpack.c.h.b16 %v563
        %v1463 = vunpack.c.l.b16 %v564
        %v1464 = vunpack.c.h.b16 %v564
        %v1465 = vunpack.c.l.b16 %v565
        %v1466 = vunpack.c.h.b16 %v565
        %v1467 = vunpack.c.l.b16 %v566
        %v1468 = vunpack.c.h.b16 %v566
        %v1469 = vunpack.c.l.b16 %v567
        %v1470 = vunpack.c.h.b16 %v567
        %v1471 = vunpack.c.l.b16 %v568
        %v1472 = vunpack.c.h.b16 %v568
        %v1473 = vpack.c.b16 %v1353, %v1345
        %v1474 = vpack.c.b16 %v1354, %v1346
        %v1475 = vpack.c.b16 %v1355, %v1347
        %v1476 = vpack.c.b16 %v1356, %v1348
        %v1477 = vpack.c.b16 %v1357, %v1349
        %v1478 = vpack.c.b16 %v1358, %v1350
        %v1479 = vpack.c.b16 %v1359, %v1351
        %v1480 = vpack.c.b16 %v1360, %v1352
        %v1481 = vpack.c.b16 %v1369, %v1361
        %v1482 = vpack.c.b16 %v1370, %v1362
        %v1483 = vpack.c.b16 %v1371, %v1363
        %v1484 = vpack.c.b16 %v1372, %v1364
        %v1485 = vpack.c.b16 %v1373, %v1365
        %v1486 = vpack.c.b16 %v1374, %v1366
        %v1487 = vpack.c.b16 %v1375, %v1367
        %v1488 = vpack.c.b16 %v1376, %v1368
        %v1489 = vpack.c.b16 %v1385, %v1377
        %v1490 = vpack.c.b16 %v1386, %v1378
        %v1491 = vpack.c.b16 %v1387, %v1379
        %v1492 = vpack.c.b16 %v1388, %v1380
        %v1493 = vpack.c.b16 %v1389, %v1381
        %v1494 = vpack.c.b16 %v1390, %v1382
        %v1495 = vpack.c.b16 %v1391, %v1383
        %v1496 = vpack.c.b16 %v1392, %v1384
        %v1497 = vpack.c.b16 %v1401, %v1393
        %v1498 = vpack.c.b16 %v1402, %v1394
        %v1499 = vpack.c.b16 %v1403, %v1395
        %v1500 = vpack.c.b16 %v1404, %v1396
        %v1501 = vpack.c.b16 %v1405, %v1397
        %v1502 = vpack.c.b16 %v1406, %v1398
        %v1503 = vpack.c.b16 %v1407, %v1399
        %v1504 = vpack.c.b16 %v1408, %v1400
        %v1505 = vpack.c.b16 %v1417, %v1409
        %v1506 = vpack.c.b16 %v1418, %v1410
        %v1507 = vpack.c.b16 %v1419, %v1411
        %v1508 = vpack.c.b16 %v1420, %v1412
        %v1509 = vpack.c.b16 %v1421, %v1413
        %v1510 = vpack.c.b16 %v1422, %v1414
        %v1511 = vpack.c.b16 %v1423, %v1415
        %v1512 = vpack.c.b16 %v1424, %v1416
        %v1513 = vpack.c.b16 %v1433, %v1425
        %v1514 = vpack.c.b16 %v1434, %v1426
        %v1515 = vpack.c.b16 %v1435, %v1427
        %v1516 = vpack.c.b16 %v1436, %v1428
        %v1517 = vpack.c.b16 %v1437, %v1429
        %v1518 = vpack.c.b16 %v1438, %v1430
        %v1519 = vpack.c.b16 %v1439, %v1431
        %v1520 = vpack.c.b16 %v1440, %v1432
        %v1521 = vpack.c.b16 %v1449, %v1441
        %v1522 = vpack.c.b16 %v1450, %v1442
        %v1523 = vpack.c.b16 %v1451, %v1443
        %v1524 = vpack.c.b16 %v1452, %v1444
        %v1525 = vpack.c.b16 %v1453, %v1445
        %v1526 = vpack.c.b16 %v1454, %v1446
        %v1527 = vpack.c.b16 %v1455, %v1447
        %v1528 = vpack.c.b16 %v1456, %v1448
        %v1529 = vpack.c.b16 %v1465, %v1457
        %v1530 = vpack.c.b16 %v1466, %v1458
        %v1531 = vpack.c.b16 %v1467, %v1459
        %v1532 = vpack.c.b16 %v1468, %v1460
        %v1533 = vpack.c.b16 %v1469, %v1461
        %v1534 = vpack.c.b16 %v1470, %v1462
        %v1535 = vpack.c.b16 %v1471, %v1463
        %v1536 = vpack.c.b16 %v1472, %v1464
        %1601 = vmatprep.subr.bf16.mxu0 %v1474
        %1602 = vmatpush1.bf16.msra.mxu0 %v1473
        %1603 = vmatprep.subr.bf16.mxu0 %v1482
        %1604 = vmatpush1.bf16.msra.mxu0 %v1481
        %1605 = vmatprep.subr.bf16.mxu0 %v1490
        %1606 = vmatpush1.bf16.msra.mxu0 %v1489
        %1607 = vmatprep.subr.bf16.mxu0 %v1498
        %1608 = vmatpush1.bf16.msra.mxu0 %v1497
        %1609 = vmatprep.subr.bf16.mxu0 %v1506
        %1610 = vmatpush1.bf16.msra.mxu0 %v1505
        %1611 = vmatprep.subr.bf16.mxu0 %v1514
        %1612 = vmatpush1.bf16.msra.mxu0 %v1513
        %1613 = vmatprep.subr.bf16.mxu0 %v1522
        %1614 = vmatpush1.bf16.msra.mxu0 %v1521
        %1615 = vmatprep.subr.bf16.mxu0 %v1530
        %1616 = vmatpush1.bf16.msra.mxu0 %v1529
        %1617 = vmatprep.subr.bf16.mxu0 0
        %1618 = vmatpush1.bf16.msra.mxu0 0
        %1619 = vmatprep.subr.bf16.mxu0 0
        %1620 = vmatpush1.bf16.msra.mxu0 0
        %1621 = vmatprep.subr.bf16.mxu0 0
        %1622 = vmatpush1.bf16.msra.mxu0 0
        %1623 = vmatprep.subr.bf16.mxu0 0
        %1624 = vmatpush1.bf16.msra.mxu0 0
        %1625 = vmatprep.subr.bf16.mxu0 0
        %1626 = vmatpush1.bf16.msra.mxu0 0
        %1627 = vmatprep.subr.bf16.mxu0 0
        %1628 = vmatpush1.bf16.msra.mxu0 0
        %1629 = vmatprep.subr.bf16.mxu0 0
        %1630 = vmatpush1.bf16.msra.mxu0 0
        %1631 = vmatprep.subr.bf16.mxu0 0
        %1632 = vmatpush1.bf16.msra.mxu0 0
        %1633 = vmatprep.mubr.bf16.mxu0 0
        %1634 = vmatmul.mubr.bf16.gmra.mrb[0].mxu0 %v1280
        %v1635 = vpop.f32.mrb[0].mxu0
        %v1636 = vadd.f32 0.0, %v1635
        %v1637 = vpop.f32.mrb[0].mxu0
        %v1638 = vadd.f32 0.0, %v1637
        %v1639 = vpop.f32.mrb[0].mxu0
        %v1640 = vadd.f32 0.0, %v1639
        %v1641 = vpop.f32.mrb[0].mxu0
        %v1642 = vadd.f32 0.0, %v1641
        %1643 = vdwg.mxu0
        %1644 = vmatprep.subr.bf16.mxu0 %v1476
        %1645 = vmatpush1.bf16.msra.mxu0 %v1475
        %1646 = vmatprep.subr.bf16.mxu0 %v1484
        %1647 = vmatpush1.bf16.msra.mxu0 %v1483
        %1648 = vmatprep.subr.bf16.mxu0 %v1492
        %1649 = vmatpush1.bf16.msra.mxu0 %v1491
        %1650 = vmatprep.subr.bf16.mxu0 %v1500
        %1651 = vmatpush1.bf16.msra.mxu0 %v1499
        %1652 = vmatprep.subr.bf16.mxu0 %v1508
        %1653 = vmatpush1.bf16.msra.mxu0 %v1507
        %1654 = vmatprep.subr.bf16.mxu0 %v1516
        %1655 = vmatpush1.bf16.msra.mxu0 %v1515
        %1656 = vmatprep.subr.bf16.mxu0 %v1524
        %1657 = vmatpush1.bf16.msra.mxu0 %v1523
        %1658 = vmatprep.subr.bf16.mxu0 %v1532
        %1659 = vmatpush1.bf16.msra.mxu0 %v1531
        %1660 = vmatprep.subr.bf16.mxu0 0
        %1661 = vmatpush1.bf16.msra.mxu0 0
        %1662 = vmatprep.subr.bf16.mxu0 0
        %1663 = vmatpush1.bf16.msra.mxu0 0
        %1664 = vmatprep.subr.bf16.mxu0 0
        %1665 = vmatpush1.bf16.msra.mxu0 0
        %1666 = vmatprep.subr.bf16.mxu0 0
        %1667 = vmatpush1.bf16.msra.mxu0 0
        %1668 = vmatprep.subr.bf16.mxu0 0
        %1669 = vmatpush1.bf16.msra.mxu0 0
        %1670 = vmatprep.subr.bf16.mxu0 0
        %1671 = vmatpush1.bf16.msra.mxu0 0
        %1672 = vmatprep.subr.bf16.mxu0 0
        %1673 = vmatpush1.bf16.msra.mxu0 0
        %1674 = vmatprep.subr.bf16.mxu0 0
        %1675 = vmatpush1.bf16.msra.mxu0 0
        %1676 = vmatprep.mubr.bf16.mxu0 0
        %1677 = vmatmul.mubr.bf16.gmra.mrb[0].mxu0 %v1280
        %v1678 = vpop.f32.mrb[0].mxu0
        %v1679 = vadd.f32 0.0, %v1678
        %v1680 = vpop.f32.mrb[0].mxu0
        %v1681 = vadd.f32 0.0, %v1680
        %v1682 = vpop.f32.mrb[0].mxu0
        %v1683 = vadd.f32 0.0, %v1682
        %v1684 = vpop.f32.mrb[0].mxu0
        %v1685 = vadd.f32 0.0, %v1684
        %1686 = vdwg.mxu0
        %1687 = vmatprep.subr.bf16.mxu0 %v1478
        %1688 = vmatpush1.bf16.msra.mxu0 %v1477
        %1689 = vmatprep.subr.bf16.mxu0 %v1486
        %1690 = vmatpush1.bf16.msra.mxu0 %v1485
        %1691 = vmatprep.subr.bf16.mxu0 %v1494
        %1692 = vmatpush1.bf16.msra.mxu0 %v1493
        %1693 = vmatprep.subr.bf16.mxu0 %v1502
        %1694 = vmatpush1.bf16.msra.mxu0 %v1501
        %1695 = vmatprep.subr.bf16.mxu0 %v1510
        %1696 = vmatpush1.bf16.msra.mxu0 %v1509
        %1697 = vmatprep.subr.bf16.mxu0 %v1518
        %1698 = vmatpush1.bf16.msra.mxu0 %v1517
        %1699 = vmatprep.subr.bf16.mxu0 %v1526
        %1700 = vmatpush1.bf16.msra.mxu0 %v1525
        %1701 = vmatprep.subr.bf16.mxu0 %v1534
        %1702 = vmatpush1.bf16.msra.mxu0 %v1533
        %1703 = vmatprep.subr.bf16.mxu0 0
        %1704 = vmatpush1.bf16.msra.mxu0 0
        %1705 = vmatprep.subr.bf16.mxu0 0
        %1706 = vmatpush1.bf16.msra.mxu0 0
        %1707 = vmatprep.subr.bf16.mxu0 0
        %1708 = vmatpush1.bf16.msra.mxu0 0
        %1709 = vmatprep.subr.bf16.mxu0 0
        %1710 = vmatpush1.bf16.msra.mxu0 0
        %1711 = vmatprep.subr.bf16.mxu0 0
        %1712 = vmatpush1.bf16.msra.mxu0 0
        %1713 = vmatprep.subr.bf16.mxu0 0
        %1714 = vmatpush1.bf16.msra.mxu0 0
        %1715 = vmatprep.subr.bf16.mxu0 0
        %1716 = vmatpush1.bf16.msra.mxu0 0
        %1717 = vmatprep.subr.bf16.mxu0 0
        %1718 = vmatpush1.bf16.msra.mxu0 0
        %1719 = vmatprep.mubr.bf16.mxu0 0
        %1720 = vmatmul.mubr.bf16.gmra.mrb[0].mxu0 %v1280
        %v1721 = vpop.f32.mrb[0].mxu0
        %v1722 = vadd.f32 0.0, %v1721
        %v1723 = vpop.f32.mrb[0].mxu0
        %v1724 = vadd.f32 0.0, %v1723
        %v1725 = vpop.f32.mrb[0].mxu0
        %v1726 = vadd.f32 0.0, %v1725
        %v1727 = vpop.f32.mrb[0].mxu0
        %v1728 = vadd.f32 0.0, %v1727
        %1729 = vdwg.mxu0
        %1730 = vmatprep.subr.bf16.mxu0 %v1480
        %1731 = vmatpush1.bf16.msra.mxu0 %v1479
        %1732 = vmatprep.subr.bf16.mxu0 %v1488
        %1733 = vmatpush1.bf16.msra.mxu0 %v1487
        %1734 = vmatprep.subr.bf16.mxu0 %v1496
        %1735 = vmatpush1.bf16.msra.mxu0 %v1495
        %1736 = vmatprep.subr.bf16.mxu0 %v1504
        %1737 = vmatpush1.bf16.msra.mxu0 %v1503
        %1738 = vmatprep.subr.bf16.mxu0 %v1512
        %1739 = vmatpush1.bf16.msra.mxu0 %v1511
        %1740 = vmatprep.subr.bf16.mxu0 %v1520
        %1741 = vmatpush1.bf16.msra.mxu0 %v1519
        %1742 = vmatprep.subr.bf16.mxu0 %v1528
        %1743 = vmatpush1.bf16.msra.mxu0 %v1527
        %1744 = vmatprep.subr.bf16.mxu0 %v1536
        %1745 = vmatpush1.bf16.msra.mxu0 %v1535
        %1746 = vmatprep.subr.bf16.mxu0 0
        %1747 = vmatpush1.bf16.msra.mxu0 0
        %1748 = vmatprep.subr.bf16.mxu0 0
        %1749 = vmatpush1.bf16.msra.mxu0 0
        %1750 = vmatprep.subr.bf16.mxu0 0
        %1751 = vmatpush1.bf16.msra.mxu0 0
        %1752 = vmatprep.subr.bf16.mxu0 0
        %1753 = vmatpush1.bf16.msra.mxu0 0
        %1754 = vmatprep.subr.bf16.mxu0 0
        %1755 = vmatpush1.bf16.msra.mxu0 0
        %1756 = vmatprep.subr.bf16.mxu0 0
        %1757 = vmatpush1.bf16.msra.mxu0 0
        %1758 = vmatprep.subr.bf16.mxu0 0
        %1759 = vmatpush1.bf16.msra.mxu0 0
        %1760 = vmatprep.subr.bf16.mxu0 0
        %1761 = vmatpush1.bf16.msra.mxu0 0
        %1762 = vmatprep.mubr.bf16.mxu0 0
        %1763 = vmatmul.mubr.bf16.gmra.mrb[0].mxu0 %v1280
        %v1764 = vpop.f32.mrb[0].mxu0
        %v1765 = vadd.f32 0.0, %v1764
        %v1766 = vpop.f32.mrb[0].mxu0
        %v1767 = vadd.f32 0.0, %v1766
        %v1768 = vpop.f32.mrb[0].mxu0
        %v1769 = vadd.f32 0.0, %v1768
        %v1770 = vpop.f32.mrb[0].mxu0
        %v1771 = vadd.f32 0.0, %v1770
        %1772 = vdwg.mxu0
        %v1775 = vunpack.c.l.b16 %v369
        %v1776 = vunpack.c.l.b16 %v370
        %v1777 = vpack.c.b16 %v1776, %v1775
        %v1779 = vsel %vm1183, %v1777, 0
        %1781 = vmatprep.subr.bf16.mxu0 %v614
        %1782 = vmatpush1.bf16.msra.mxu0 %v613
        %1783 = vmatprep.subr.bf16.mxu0 0
        %1784 = vmatpush1.bf16.msra.mxu0 0
        %1785 = vmatprep.subr.bf16.mxu0 0
        %1786 = vmatpush1.bf16.msra.mxu0 0
        %1787 = vmatprep.subr.bf16.mxu0 0
        %1788 = vmatpush1.bf16.msra.mxu0 0
        %1789 = vmatprep.subr.bf16.mxu0 0
        %1790 = vmatpush1.bf16.msra.mxu0 0
        %1791 = vmatprep.subr.bf16.mxu0 0
        %1792 = vmatpush1.bf16.msra.mxu0 0
        %1793 = vmatprep.subr.bf16.mxu0 0
        %1794 = vmatpush1.bf16.msra.mxu0 0
        %1795 = vmatprep.subr.bf16.mxu0 0
        %1796 = vmatpush1.bf16.msra.mxu0 0
        %1797 = vmatprep.subr.bf16.mxu0 0
        %1798 = vmatpush1.bf16.msra.mxu0 0
        %1799 = vmatprep.subr.bf16.mxu0 0
        %1800 = vmatpush1.bf16.msra.mxu0 0
        %1801 = vmatprep.subr.bf16.mxu0 0
        %1802 = vmatpush1.bf16.msra.mxu0 0
        %1803 = vmatprep.subr.bf16.mxu0 0
        %1804 = vmatpush1.bf16.msra.mxu0 0
        %1805 = vmatprep.subr.bf16.mxu0 0
        %1806 = vmatpush1.bf16.msra.mxu0 0
        %1807 = vmatprep.subr.bf16.mxu0 0
        %1808 = vmatpush1.bf16.msra.mxu0 0
        %1809 = vmatprep.subr.bf16.mxu0 0
        %1810 = vmatpush1.bf16.msra.mxu0 0
        %1811 = vmatprep.subr.bf16.mxu0 0
        %1812 = vmatpush1.bf16.msra.mxu0 0
        %1813 = vmatprep.mubr.bf16.mxu0 0
        %1814 = vmatmul.mubr.bf16.gmra.mrb[0].mxu0 %v1779
        %v1815 = vpop.f32.mrb[0].mxu0
        %v1816 = vadd.f32 %v1636, %v1815
        %v1817 = vpop.f32.mrb[0].mxu0
        %v1818 = vadd.f32 %v1638, %v1817
        %v1819 = vpop.f32.mrb[0].mxu0
        %v1820 = vadd.f32 %v1640, %v1819
        %v1821 = vpop.f32.mrb[0].mxu0
        %v1822 = vadd.f32 %v1642, %v1821
        %1823 = vdwg.mxu0
        %1824 = vmatprep.subr.bf16.mxu0 %v616
        %1825 = vmatpush1.bf16.msra.mxu0 %v615
        %1826 = vmatprep.subr.bf16.mxu0 0
        %1827 = vmatpush1.bf16.msra.mxu0 0
        %1828 = vmatprep.subr.bf16.mxu0 0
        %1829 = vmatpush1.bf16.msra.mxu0 0
        %1830 = vmatprep.subr.bf16.mxu0 0
        %1831 = vmatpush1.bf16.msra.mxu0 0
        %1832 = vmatprep.subr.bf16.mxu0 0
        %1833 = vmatpush1.bf16.msra.mxu0 0
        %1834 = vmatprep.subr.bf16.mxu0 0
        %1835 = vmatpush1.bf16.msra.mxu0 0
        %1836 = vmatprep.subr.bf16.mxu0 0
        %1837 = vmatpush1.bf16.msra.mxu0 0
        %1838 = vmatprep.subr.bf16.mxu0 0
        %1839 = vmatpush1.bf16.msra.mxu0 0
        %1840 = vmatprep.subr.bf16.mxu0 0
        %1841 = vmatpush1.bf16.msra.mxu0 0
        %1842 = vmatprep.subr.bf16.mxu0 0
        %1843 = vmatpush1.bf16.msra.mxu0 0
        %1844 = vmatprep.subr.bf16.mxu0 0
        %1845 = vmatpush1.bf16.msra.mxu0 0
        %1846 = vmatprep.subr.bf16.mxu0 0
        %1847 = vmatpush1.bf16.msra.mxu0 0
        %1848 = vmatprep.subr.bf16.mxu0 0
        %1849 = vmatpush1.bf16.msra.mxu0 0
        %1850 = vmatprep.subr.bf16.mxu0 0
        %1851 = vmatpush1.bf16.msra.mxu0 0
        %1852 = vmatprep.subr.bf16.mxu0 0
        %1853 = vmatpush1.bf16.msra.mxu0 0
        %1854 = vmatprep.subr.bf16.mxu0 0
        %1855 = vmatpush1.bf16.msra.mxu0 0
        %1856 = vmatprep.mubr.bf16.mxu0 0
        %1857 = vmatmul.mubr.bf16.gmra.mrb[0].mxu0 %v1779
        %v1858 = vpop.f32.mrb[0].mxu0
        %v1859 = vadd.f32 %v1679, %v1858
        %v1860 = vpop.f32.mrb[0].mxu0
        %v1861 = vadd.f32 %v1681, %v1860
        %v1862 = vpop.f32.mrb[0].mxu0
        %v1863 = vadd.f32 %v1683, %v1862
        %v1864 = vpop.f32.mrb[0].mxu0
        %v1865 = vadd.f32 %v1685, %v1864
        %1866 = vdwg.mxu0
        %1867 = vmatprep.subr.bf16.mxu0 %v618
        %1868 = vmatpush1.bf16.msra.mxu0 %v617
        %1869 = vmatprep.subr.bf16.mxu0 0
        %1870 = vmatpush1.bf16.msra.mxu0 0
        %1871 = vmatprep.subr.bf16.mxu0 0
        %1872 = vmatpush1.bf16.msra.mxu0 0
        %1873 = vmatprep.subr.bf16.mxu0 0
        %1874 = vmatpush1.bf16.msra.mxu0 0
        %1875 = vmatprep.subr.bf16.mxu0 0
        %1876 = vmatpush1.bf16.msra.mxu0 0
        %1877 = vmatprep.subr.bf16.mxu0 0
        %1878 = vmatpush1.bf16.msra.mxu0 0
        %1879 = vmatprep.subr.bf16.mxu0 0
        %1880 = vmatpush1.bf16.msra.mxu0 0
        %1881 = vmatprep.subr.bf16.mxu0 0
        %1882 = vmatpush1.bf16.msra.mxu0 0
        %1883 = vmatprep.subr.bf16.mxu0 0
        %1884 = vmatpush1.bf16.msra.mxu0 0
        %1885 = vmatprep.subr.bf16.mxu0 0
        %1886 = vmatpush1.bf16.msra.mxu0 0
        %1887 = vmatprep.subr.bf16.mxu0 0
        %1888 = vmatpush1.bf16.msra.mxu0 0
        %1889 = vmatprep.subr.bf16.mxu0 0
        %1890 = vmatpush1.bf16.msra.mxu0 0
        %1891 = vmatprep.subr.bf16.mxu0 0
        %1892 = vmatpush1.bf16.msra.mxu0 0
        %1893 = vmatprep.subr.bf16.mxu0 0
        %1894 = vmatpush1.bf16.msra.mxu0 0
        %1895 = vmatprep.subr.bf16.mxu0 0
        %1896 = vmatpush1.bf16.msra.mxu0 0
        %1897 = vmatprep.subr.bf16.mxu0 0
        %1898 = vmatpush1.bf16.msra.mxu0 0
        %1899 = vmatprep.mubr.bf16.mxu0 0
        %1900 = vmatmul.mubr.bf16.gmra.mrb[0].mxu0 %v1779
        %v1901 = vpop.f32.mrb[0].mxu0
        %v1902 = vadd.f32 %v1722, %v1901
        %v1903 = vpop.f32.mrb[0].mxu0
        %v1904 = vadd.f32 %v1724, %v1903
        %v1905 = vpop.f32.mrb[0].mxu0
        %v1906 = vadd.f32 %v1726, %v1905
        %v1907 = vpop.f32.mrb[0].mxu0
        %v1908 = vadd.f32 %v1728, %v1907
        %1909 = vdwg.mxu0
        %1910 = vmatprep.subr.bf16.mxu0 %v620
        %1911 = vmatpush1.bf16.msra.mxu0 %v619
        %1912 = vmatprep.subr.bf16.mxu0 0
        %1913 = vmatpush1.bf16.msra.mxu0 0
        %1914 = vmatprep.subr.bf16.mxu0 0
        %1915 = vmatpush1.bf16.msra.mxu0 0
        %1916 = vmatprep.subr.bf16.mxu0 0
        %1917 = vmatpush1.bf16.msra.mxu0 0
        %1918 = vmatprep.subr.bf16.mxu0 0
        %1919 = vmatpush1.bf16.msra.mxu0 0
        %1920 = vmatprep.subr.bf16.mxu0 0
        %1921 = vmatpush1.bf16.msra.mxu0 0
        %1922 = vmatprep.subr.bf16.mxu0 0
        %1923 = vmatpush1.bf16.msra.mxu0 0
        %1924 = vmatprep.subr.bf16.mxu0 0
        %1925 = vmatpush1.bf16.msra.mxu0 0
        %1926 = vmatprep.subr.bf16.mxu0 0
        %1927 = vmatpush1.bf16.msra.mxu0 0
        %1928 = vmatprep.subr.bf16.mxu0 0
        %1929 = vmatpush1.bf16.msra.mxu0 0
        %1930 = vmatprep.subr.bf16.mxu0 0
        %1931 = vmatpush1.bf16.msra.mxu0 0
        %1932 = vmatprep.subr.bf16.mxu0 0
        %1933 = vmatpush1.bf16.msra.mxu0 0
        %1934 = vmatprep.subr.bf16.mxu0 0
        %1935 = vmatpush1.bf16.msra.mxu0 0
        %1936 = vmatprep.subr.bf16.mxu0 0
        %1937 = vmatpush1.bf16.msra.mxu0 0
        %1938 = vmatprep.subr.bf16.mxu0 0
        %1939 = vmatpush1.bf16.msra.mxu0 0
        %1940 = vmatprep.subr.bf16.mxu0 0
        %1941 = vmatpush1.bf16.msra.mxu0 0
        %1942 = vmatprep.mubr.bf16.mxu0 0
        %1943 = vmatmul.mubr.bf16.gmra.mrb[0].mxu0 %v1779
        %v1944 = vpop.f32.mrb[0].mxu0
        %v1945 = vadd.f32 %v1765, %v1944
        %v1946 = vpop.f32.mrb[0].mxu0
        %v1947 = vadd.f32 %v1767, %v1946
        %v1948 = vpop.f32.mrb[0].mxu0
        %v1949 = vadd.f32 %v1769, %v1948
        %v1950 = vpop.f32.mrb[0].mxu0
        %v1951 = vadd.f32 %v1771, %v1950
        %1952 = vdwg.mxu0
        %v1953 = vadd.f32 %v1816, %v574
        %v1954 = vadd.f32 %v1818, %v574
        %v1955 = vadd.f32 %v1859, %v574
        %v1956 = vadd.f32 %v1861, %v574
        %v1957 = vadd.f32 %v1902, %v574
        %v1958 = vadd.f32 %v1904, %v574
        %v1959 = vadd.f32 %v1945, %v574
        %v1960 = vadd.f32 %v1947, %v574
        %v1961 = vadd.f32 %v1820, %v579
        %v1962 = vadd.f32 %v1822, %v579
        %v1963 = vadd.f32 %v1863, %v579
        %v1964 = vadd.f32 %v1865, %v579
        %v1965 = vadd.f32 %v1906, %v579
        %v1966 = vadd.f32 %v1908, %v579
        %v1967 = vadd.f32 %v1949, %v579
        %v1968 = vadd.f32 %v1951, %v579
        %v1969 = vmax.f32 %v1953, 0.0
        %v1970 = vmax.f32 %v1954, 0.0
        %v1971 = vmax.f32 %v1955, 0.0
        %v1972 = vmax.f32 %v1956, 0.0
        %v1973 = vmax.f32 %v1957, 0.0
        %v1974 = vmax.f32 %v1958, 0.0
        %v1975 = vmax.f32 %v1959, 0.0
        %v1976 = vmax.f32 %v1960, 0.0
        %v1977 = vmax.f32 %v1961, 0.0
        %v1978 = vmax.f32 %v1962, 0.0
        %v1979 = vmax.f32 %v1963, 0.0
        %v1980 = vmax.f32 %v1964, 0.0
        %v1981 = vmax.f32 %v1965, 0.0
        %v1982 = vmax.f32 %v1966, 0.0
        %v1983 = vmax.f32 %v1967, 0.0
        %v1984 = vmax.f32 %v1968, 0.0
        %1985 = vst [vmem:[%s367] sm:$0xff] %v1969
        %1986 = vst [vmem:[%s367 + $0x8] sm:$0xff] %v1970
        %1987 = vst [vmem:[%s367 + $0x10] sm:$0xff] %v1971
        %1988 = vst [vmem:[%s367 + $0x18] sm:$0xff] %v1972
        %1989 = vst [vmem:[%s367 + $0x20] sm:$0xff] %v1973
        %1990 = vst [vmem:[%s367 + $0x28] sm:$0xff] %v1974
        %1991 = vst [vmem:[%s367 + $0x30] sm:$0xff] %v1975
        %1992 = vst [vmem:[%s367 + $0x38] sm:$0xff] %v1976
        %1993 = vst [vmem:[%s367 + $0x40] sm:$0xff] %v1977
        %1994 = vst [vmem:[%s367 + $0x48] sm:$0xff] %v1978
        %1995 = vst [vmem:[%s367 + $0x50] sm:$0xff] %v1979
        %1996 = vst [vmem:[%s367 + $0x58] sm:$0xff] %v1980
        %1997 = vst [vmem:[%s367 + $0x60] sm:$0xff] %v1981
        %1998 = vst [vmem:[%s367 + $0x68] sm:$0xff] %v1982
        %1999 = vst [vmem:[%s367 + $0x70] sm:$0xff] %v1983
        %2000 = vst [vmem:[%s367 + $0x78] sm:$0xff] %v1984
        %s2001 = sand.u32 %s208, 1
        %s2002 = scalar_lea.sflag [#allocation4], %s2001
        %s2003 = sand.u32 %s208, 1
        %s2004 = smul.addr %s2003, 128
        %s2005 = scalar_lea.vmem [#allocation10], %s2004
        // Predicated region
        $region69: #{tpu_custom_call.1} parent=51 // pred_check
          %p2006 = pneg %p218
        $region70: #{tpu_custom_call.1} parent=51 // pred_check_branch
          %2008 = sbr.rel (%p2006) target = $region72
        $region71: #{tpu_custom_call.1} parent=51 // pred_region
          %s2010 = ssub.s32 2048, 2048
          %2011 = vsyncadd %s2002, %s2010
          %s2012 = smul.addr %s27, 16
          %s2013 = smul.addr %s2012, 128
          %s2014 = scalar_lea.hbm %s8, %s2013
          %s2015 = sshll.u32 %s2005, 4
          %s2016 = int_to_ptr.vmem [resolvable:$true] %s2015
          %2021 = dma.vmem_to_hbm [thread:$0]  %s2016, 2048, %s2014, %s2002, 1024, 1024, 64
        $region72: #{tpu_custom_call.1} parent=51 // pred_fallthru
          _
      $region52: #{tpu_custom_call.1} parent=5 // pred_fallthru
        _
      %p2022 = scmp.le.s32.totalorder 2, %s22
      // Predicated region
      $region73: #{tpu_custom_call.1} parent=5 // pred_check
        %p2023 = pneg %p2022
      $region74: #{tpu_custom_call.1} parent=5 // pred_check_branch
        %2025 = sbr.rel (%p2023) target = $region76
      $region75: #{tpu_custom_call.1} parent=5 // pred_region
        %s2026 = ssub.s32 %s22, 2
        // Predicated region
        $region77: #{tpu_custom_call.1} parent=75 // pred_check
          %p2027 = pneg %p224
        $region78: #{tpu_custom_call.1} parent=75 // pred_check_branch
          %2029 = sbr.rel (%p2027) target = $region80
        $region79: #{tpu_custom_call.1} parent=75 // pred_region
          %s2030 = sand.u32 %s209, 1
          %s2031 = scalar_lea.sflag [#allocation4], %s2030
          %s2032 = sand.u32 %s209, 1
          %s2033 = smul.addr %s2032, 128
          %s2034 = scalar_lea.vmem [#allocation10], %s2033
          %2035 = dma.done %s2031, 2048
        $region80: #{tpu_custom_call.1} parent=75 // pred_fallthru
          _
      $region76: #{tpu_custom_call.1} parent=5 // pred_fallthru
        _
    $region6: #{tpu_custom_call.1} parent=1 // loop_footer
      %s26 = sadd.s32 1, %s22
    $region7: #{tpu_custom_call.1} parent=1 // loop_footer_branch
      %21 = sbr.rel target = $region3
    $region8: #{tpu_custom_call.1} parent=1 // loop_exit
      _
    %2036 = vsyncpa [#allocation3], 1
    %s2037 = scalar_lea.sflag [#allocation3], 1
    %2038 = vsyncpa %s2037, 1
    %2039 = vsyncpa [#allocation6], 1
    %2040 = vsyncpa [#allocation9], 1
    %2041 = vsyncpa [#allocation4], 1
    %s2042 = scalar_lea.sflag [#allocation4], 1
    %2043 = vsyncpa %s2042, 1

</llo_original>
